<compile_context>
chip_gen: v5e
topology: v5e:2x2
jax: 0.10.0
libtpu: 0.0.40
codegen_flags: <defaults>
</compile_context>

<pallas_src>
import functools

import jax
import jax.numpy as jnp
import numpy as np
from jax import lax
from jax.experimental import pallas as pl
from jax.experimental.pallas import tpu as pltpu


def _conv_taps():
    """(kh, kw) -> (phase, row-offset, col-offset) in the phase-split layout.

    phase p = 2*a + b holds rows of parity a / cols of parity b of the 1-padded
    input; slab(p, dr, dc)[i, j] == padded_x[2*(r0+i+dr) + a, 2*(j+dc) + b].
    The conv tap (kh, kw) reads padded row 2R+kh, col 2C+kw  ->  2*dr + a = kh.
    """
    taps = []
    for kh in range(3):
        dr, a = (1, 0) if kh == 2 else (0, kh)
        for kw in range(3):
            dc, b = (1, 0) if kw == 2 else (0, kw)
            taps.append((2 * a + b, dr, dc))
    return tuple(taps)


_TAPS = _conv_taps()


def _downsampler_kernel(xm_ref, w_ref, scale_ref, shift_ref, out_ref, *, use_mxu):
    """One (batch, output-row-tile) grid step.

    xm_ref    : (4*Cin, Tr+1, Wo+1) pre-haloed phase-packed block          (VMEM)
    w_ref     : MXU: (Cconv, 9*Cin+1) scale-folded weights + shift column  (VMEM)
                VPU: (9*Cin*Cconv,)   scale-folded weights, HWIO flattened (SMEM)
    scale_ref : (Cout,) folded BN scale (pool channels only)               (SMEM)
    shift_ref : (Cout,) folded BN shift (conv bias folded in)              (SMEM)
    out_ref   : (Cout, Tr, Wo) NCHW output tile                            (VMEM)
    """
    cout, tr, wo = out_ref.shape
    cin = xm_ref.shape[0] // 4
    cconv = cout - cin

    def slab(p, c, dr, dc):
        # (Tr, Wo) f32 view of one phase/channel, shifted by the tap offsets.
        return xm_ref[p * cin + c, dr:dr + tr, dc:dc + wo].astype(jnp.float32)

    # ---- 3x3 stride-2 conv (BN scale already folded into the weights) ----
    if use_mxu:
        # MXU im2col: one (Cconv, 9*Cin+1) x (9*Cin+1, Wo) matmul per output row.
        # Channel blocks stack on sublanes via a plain major-axis concatenate, so
        # no in-kernel relayouts/reshapes are needed; the ones row folds the
        # BN/bias shift into the matmul.
        w_mat = w_ref[...]                              # (Cconv, 9*Cin + 1)
        ones = jnp.ones((1, wo), xm_ref.dtype)
        for i in range(tr):
            rhs = jnp.concatenate(
                [xm_ref[p * cin:(p + 1) * cin, dr + i, dc:dc + wo]
                 for (p, dr, dc) in _TAPS] + [ones],
                axis=0)                                 # (9*Cin + 1, Wo)
            res = jnp.dot(w_mat, rhs,
                          preferred_element_type=jnp.float32)  # (Cconv, Wo)
            out_ref[0:cconv, i, :] = jnp.maximum(res, 0.0).astype(out_ref.dtype)
    else:
        # VPU broadcast-FMA path for small-channel blocks.  Taps outer /
        # output-channel inner -> only Cconv accumulators (+1 slab) stay live,
        # bounding vreg pressure at realistic widths.
        accs = [None] * cconv
        for t, (p, dr, dc) in enumerate(_TAPS):
            for c in range(cin):
                s = slab(p, c, dr, dc)
                for oc in range(cconv):
                    wv = w_ref[(t * cin + c) * cconv + oc]
                    accs[oc] = wv * s if accs[oc] is None else accs[oc] + wv * s
        for oc in range(cconv):
            out_ref[oc] = jnp.maximum(accs[oc] + shift_ref[oc],
                                      0.0).astype(out_ref.dtype)

    # ---- 2x2 stride-2 maxpool over the same phase slabs + BN + ReLU ----
    # (scale cannot be folded into max(); applied per pool channel here.)
    for c in range(cin):
        oc = cconv + c
        pooled = jnp.maximum(
            jnp.maximum(slab(3, c, 0, 0), slab(2, c, 0, 1)),
            jnp.maximum(slab(1, c, 1, 0), slab(0, c, 1, 1)))
        out_ref[oc] = jnp.maximum(pooled * scale_ref[oc] + shift_ref[oc],
                                  0.0).astype(out_ref.dtype)


def _tile_bytes(t, wo, cin, cout, itemsize):
    """Per-grid-step VMEM working set: double-buffered blocks + f32 temporaries."""
    x_blk = 4 * cin * (t + 1) * (wo + 1) * itemsize
    o_blk = cout * t * wo * itemsize
    w_blk = cout * (9 * cin + 1) * itemsize
    live = (9 * cin + 2 * cout) * t * wo * 4          # in-kernel f32 headroom
    return 2 * (x_blk + o_blk + w_blk) + live


def _vmem_budget():
    """(per-step tile budget, scoped-VMEM cap) — TPU-generation aware."""
    cap = 64 << 20                                    # conservative fallback
    try:
        cap = int(getattr(pltpu.get_tpu_info(), "vmem_capacity_bytes", cap))
    except Exception:
        pass
    if cap <= (64 << 20):                             # v7x-class: 64 MiB per TC
        return cap // 3, min(40 << 20, cap * 5 // 8)
    return cap * 3 // 8, min(80 << 20, cap * 5 // 8)  # v5e/v6e: 128 MiB


def _pick_row_tile(ho, wo, cin, cout, itemsize, budget_bytes, want_splits):
    """Largest divisor of Ho respecting output-block tiling rules and the budget."""
    granule = {4: 8, 2: 16, 1: 32}.get(itemsize, 8)
    compliant = [t for t in range(1, ho + 1)
                 if ho % t == 0 and (t % granule == 0 or t == ho)]
    fitting = [t for t in compliant
               if _tile_bytes(t, wo, cin, cout, itemsize) <= budget_bytes]
    if not fitting:
        return min(compliant)                         # vmem_limit adapts below
    tr = max(fitting)
    if want_splits and ho // tr < 2:                  # keep >=2 grid steps (v7x)
        smaller = [t for t in fitting if ho // t >= 2]
        if smaller:
            tr = max(smaller)
    return tr


@functools.partial(jax.jit, static_argnames=("storage_dtype",))
def downsampler_block(x, conv_w, conv_b, bn_gamma, bn_beta, bn_mean, bn_var,
                      eps=1e-3, storage_dtype=None):
    """Fused DownsamplerBlock forward (eval-mode BatchNorm).

    x       : (N, Cin, H, W)        NCHW input (PyTorch layout)
    conv_w  : (Cconv, Cin, 3, 3)    conv weight, OIHW (PyTorch layout)
    conv_b  : (Cconv,)              conv bias
    bn_*    : (Cout,)               eval-mode BatchNorm params, Cout = Cin + Cconv
    returns : (N, Cout, H//2, W//2) NCHW
    """
    n, cin, h, w = x.shape
    if h % 2 != 0 or w % 2 != 0:
        raise ValueError(f"DownsamplerBlock needs even H, W; got {(h, w)}")
    cconv = conv_w.shape[0]
    cout = cconv + cin
    ho, wo = h // 2, w // 2

    sdtype = jnp.dtype(x.dtype if storage_dtype is None else storage_dtype)
    xs = x.astype(sdtype)

    budget, scoped_cap = _vmem_budget()
    tr = _pick_row_tile(ho, wo, cin, cout, sdtype.itemsize, budget,
                        want_splits=(n < 2))
    nrt = ho // tr

    # ---- Fold eval-mode BatchNorm + conv bias into per-channel scale/shift ----
    scale = (bn_gamma * lax.rsqrt(bn_var + eps)).astype(jnp.float32)
    shift = (bn_beta - bn_mean * scale).astype(jnp.float32)
    shift = shift.at[:cconv].add(conv_b.astype(jnp.float32) * scale[:cconv])
    # BN scale is linear w.r.t. the conv -> fold it into the conv weights too
    # (the pool channels still need it: max() does not commute with scaling).
    w_scaled = conv_w.astype(jnp.float32) * scale[:cconv].reshape(-1, 1, 1, 1)

    # Conv on the MXU once 9*Cin*Cconv is large enough to pay for it; the pure
    # VPU broadcast-FMA path only for the small-channel first blocks.
    use_mxu = 9 * cin * cconv >= 512
    if use_mxu:
        # (Cconv, 9*Cin) with column index (kh*3+kw)*Cin + c, plus the BN/bias
        # shift as an extra column (pairs with a ones row in the kernel).
        w_mat = jnp.transpose(w_scaled, (0, 2, 3, 1)).reshape(cconv, 9 * cin)
        w_arg = jnp.concatenate([w_mat, shift[:cconv, None]], axis=1)
        w_arg = w_arg.astype(sdtype)      # bf16 storage -> bf16 MXU operands
        w_spec = pl.BlockSpec((cconv, 9 * cin + 1), lambda bi, ri: (0, 0))
    else:
        # Flat HWIO: idx = ((kh*3+kw)*Cin + c)*Cconv + oc, scalar loads from SMEM.
        w_arg = jnp.transpose(w_scaled, (2, 3, 1, 0)).reshape(-1)
        w_spec = pl.BlockSpec(memory_space=pltpu.MemorySpace.SMEM)

    # ---- Space-to-depth parity split + per-row-tile halo, single XLA pass ----
    # phases[b, (2a+bp)*Cin + c, i, j] = padded_x[b, c, 2i + a, 2j + bp]
    xp = jnp.pad(xs, ((0, 0), (0, 0), (1, 1), (1, 1)))        # (N, Cin, H+2, W+2)
    phases = xp.reshape(n, cin, ho + 1, 2, wo + 1, 2)
    phases = jnp.transpose(phases, (0, 3, 5, 1, 2, 4)).reshape(
        n, 4 * cin, ho + 1, wo + 1)
    main = phases[:, :, :ho, :].reshape(n, 4 * cin, nrt, tr, wo + 1)
    halo = phases[:, :, tr::tr, :].reshape(n, 4 * cin, nrt, 1, wo + 1)
    x_tiles = jnp.transpose(jnp.concatenate([main, halo], axis=3),
                            (0, 2, 1, 3, 4))       # (N, nrt, 4*Cin, Tr+1, Wo+1)

    est_vmem = _tile_bytes(tr, wo, cin, cout, sdtype.itemsize)
    vmem_limit = None
    if est_vmem > (12 << 20):
        vmem_limit = min(max(est_vmem + est_vmem // 4, 32 << 20), scoped_cap)

    kernel = functools.partial(_downsampler_kernel, use_mxu=use_mxu)
    out = pl.pallas_call(
        kernel,
        out_shape=jax.ShapeDtypeStruct((n, cout, ho, wo), sdtype),
        grid_spec=pltpu.PrefetchScalarGridSpec(
            num_scalar_prefetch=0,
            grid=(n, nrt),
            in_specs=[
                pl.BlockSpec((None, None, 4 * cin, tr + 1, wo + 1),
                             lambda bi, ri: (bi, ri, 0, 0, 0)),
                w_spec,
                pl.BlockSpec(memory_space=pltpu.MemorySpace.SMEM),
                pl.BlockSpec(memory_space=pltpu.MemorySpace.SMEM),
            ],
            out_specs=pl.BlockSpec((None, cout, tr, wo),
                                   lambda bi, ri: (bi, 0, ri, 0)),
        ),
        compiler_params=pltpu.CompilerParams(
            dimension_semantics=("parallel", "parallel"),
            vmem_limit_bytes=vmem_limit,
        ),
    )(x_tiles, w_arg, scale, shift)
    return out


def _reference(x, w_oihw, bias, gamma, beta, mean, var, eps):
    """Pure-JAX reference mirroring the PyTorch forward (eval-mode BN)."""
    conv = lax.conv_general_dilated(
        x, w_oihw, window_strides=(2, 2), padding=((1, 1), (1, 1)),
        dimension_numbers=("NCHW", "OIHW", "NCHW"),
        precision=lax.Precision.HIGHEST,
    ) + bias.reshape(1, -1, 1, 1)
    pool = lax.reduce_window(
        x, -jnp.inf, lax.max,
        window_dimensions=(1, 1, 2, 2), window_strides=(1, 1, 2, 2),
        padding="VALID")
    out = jnp.concatenate([conv, pool], axis=1)
    out = ((out - mean.reshape(1, -1, 1, 1))
           * (gamma.reshape(1, -1, 1, 1)
              / jnp.sqrt(var.reshape(1, -1, 1, 1) + eps))
           + beta.reshape(1, -1, 1, 1))
    return jnp.maximum(out, 0.0)


def _make_inputs(key, n, cin, nout, h, w):
    cconv = nout - cin
    ks = jax.random.split(key, 7)
    x = jax.random.normal(ks[0], (n, cin, h, w), jnp.float32)
    wgt = 0.1 * jax.random.normal(ks[1], (cconv, cin, 3, 3), jnp.float32)
    b = 0.1 * jax.random.normal(ks[2], (cconv,), jnp.float32)
    gamma = 1.0 + 0.1 * jax.random.normal(ks[3], (nout,), jnp.float32)
    beta = 0.1 * jax.random.normal(ks[4], (nout,), jnp.float32)
    mean = 0.1 * jax.random.normal(ks[5], (nout,), jnp.float32)
    var = 1.0 + 0.5 * jax.random.uniform(ks[6], (nout,), jnp.float32)
    return x, wgt, b, gamma, beta, mean, var


if __name__ == "__main__":
    EPS = 1e-3
    k1, k2 = jax.random.split(jax.random.PRNGKey(0))

    # --- First-block shapes (VPU broadcast-FMA conv path), f32 ---
    args1 = _make_inputs(k1, n=2, cin=4, nout=8, h=16, w=16)
    out = jax.block_until_ready(downsampler_block(*args1, eps=EPS))
    ref = jax.block_until_ready(_reference(*args1, EPS))
    assert out.shape == (2, 8, 8, 8), out.shape
    np.testing.assert_allclose(np.asarray(out), np.asarray(ref),
                               rtol=1e-4, atol=1e-4)

    # --- Mid-network shapes (MXU im2col conv path), f32 ---
    # Looser tolerance: the default MXU matmul precision may round f32 operands.
    args2 = _make_inputs(k2, n=1, cin=16, nout=64, h=32, w=32)
    out2 = jax.block_until_ready(downsampler_block(*args2, eps=EPS))
    ref2 = jax.block_until_ready(_reference(*args2, EPS))
    assert out2.shape == (1, 64, 16, 16), out2.shape
    np.testing.assert_allclose(np.asarray(out2), np.asarray(ref2),
                               rtol=2e-2, atol=2e-2)

    # --- bf16-in-HBM storage path (bandwidth lever on v6e/v7x) ---
    out_bf16 = jax.block_until_ready(
        downsampler_block(*args1, eps=EPS, storage_dtype=jnp.bfloat16))
    assert out_bf16.shape == (2, 8, 8, 8), out_bf16.shape
    np.testing.assert_allclose(
        np.asarray(out_bf16.astype(jnp.float32)), np.asarray(ref),
        rtol=1e-1, atol=1e-1)

    print("KERNEL_OK")
</pallas_src>

<mosaic_0001>
module attributes {stable_mosaic.version = 11 : i64} {
  func.func @_downsampler_kernel(%arg0: i32, %arg1: i32, %arg2: memref<1x1x16x9x9xf32, #tpu.memory_space<vmem>>, %arg3: memref<144xf32, #tpu.memory_space<smem>>, %arg4: memref<8xf32, #tpu.memory_space<smem>>, %arg5: memref<8xf32, #tpu.memory_space<smem>>, %arg6: memref<1x8x8x8xf32, #tpu.memory_space<vmem>>) attributes {dimension_semantics = [#tpu.dimension_semantics<parallel>, #tpu.dimension_semantics<parallel>], iteration_bounds = array<i64: 2, 1>, scalar_prefetch = 0 : i64, scratch_operands = 0 : i64, tpu.core_type = #tpu.core_type<tc>, window_params = [{transform_indices = @transform_0, window_bounds = array<i64: 1, 1, 16, 9, 9>}, {transform_indices = @transform_1, window_bounds = array<i64: 144>}, {transform_indices = @transform_2, window_bounds = array<i64: 8>}, {transform_indices = @transform_3, window_bounds = array<i64: 8>}, {transform_indices = @transform_4, window_bounds = array<i64: 1, 8, 8, 8>}]} {
    %c0 = arith.constant 0 : index
    %c0_0 = arith.constant 0 : index
    %c0_1 = arith.constant 0 : index
    %c0_2 = arith.constant 0 : index
    %c0_3 = arith.constant 0 : index
    %0 = vector.load %arg2[%c0, %c0_0, %c0_1, %c0_2, %c0_3] : memref<1x1x16x9x9xf32, #tpu.memory_space<vmem>>, vector<1x1x1x8x8xf32>
    %1 = vector.shape_cast %0 : vector<1x1x1x8x8xf32> to vector<8x8xf32>
    %c0_4 = arith.constant 0 : index
    %2 = memref.load %arg3[%c0_4] : memref<144xf32, #tpu.memory_space<smem>>
    %3 = vector.broadcast %2 : f32 to vector<8x8xf32>
    %4 = arith.mulf %3, %1 : vector<8x8xf32>
    %c1 = arith.constant 1 : index
    %5 = memref.load %arg3[%c1] : memref<144xf32, #tpu.memory_space<smem>>
    %6 = vector.broadcast %5 : f32 to vector<8x8xf32>
    %7 = arith.mulf %6, %1 : vector<8x8xf32>
    %c2 = arith.constant 2 : index
    %8 = memref.load %arg3[%c2] : memref<144xf32, #tpu.memory_space<smem>>
    %9 = vector.broadcast %8 : f32 to vector<8x8xf32>
    %10 = arith.mulf %9, %1 : vector<8x8xf32>
    %c3 = arith.constant 3 : index
    %11 = memref.load %arg3[%c3] : memref<144xf32, #tpu.memory_space<smem>>
    %12 = vector.broadcast %11 : f32 to vector<8x8xf32>
    %13 = arith.mulf %12, %1 : vector<8x8xf32>
    %c0_5 = arith.constant 0 : index
    %c0_6 = arith.constant 0 : index
    %c1_7 = arith.constant 1 : index
    %c0_8 = arith.constant 0 : index
    %c0_9 = arith.constant 0 : index
    %14 = vector.load %arg2[%c0_5, %c0_6, %c1_7, %c0_8, %c0_9] : memref<1x1x16x9x9xf32, #tpu.memory_space<vmem>>, vector<1x1x1x8x8xf32>
    %15 = vector.shape_cast %14 : vector<1x1x1x8x8xf32> to vector<8x8xf32>
    %c4 = arith.constant 4 : index
    %16 = memref.load %arg3[%c4] : memref<144xf32, #tpu.memory_space<smem>>
    %17 = vector.broadcast %16 : f32 to vector<8x8xf32>
    %18 = arith.mulf %17, %15 : vector<8x8xf32>
    %19 = arith.addf %4, %18 : vector<8x8xf32>
    %c5 = arith.constant 5 : index
    %20 = memref.load %arg3[%c5] : memref<144xf32, #tpu.memory_space<smem>>
    %21 = vector.broadcast %20 : f32 to vector<8x8xf32>
    %22 = arith.mulf %21, %15 : vector<8x8xf32>
    %23 = arith.addf %7, %22 : vector<8x8xf32>
    %c6 = arith.constant 6 : index
    %24 = memref.load %arg3[%c6] : memref<144xf32, #tpu.memory_space<smem>>
    %25 = vector.broadcast %24 : f32 to vector<8x8xf32>
    %26 = arith.mulf %25, %15 : vector<8x8xf32>
    %27 = arith.addf %10, %26 : vector<8x8xf32>
    %c7 = arith.constant 7 : index
    %28 = memref.load %arg3[%c7] : memref<144xf32, #tpu.memory_space<smem>>
    %29 = vector.broadcast %28 : f32 to vector<8x8xf32>
    %30 = arith.mulf %29, %15 : vector<8x8xf32>
    %31 = arith.addf %13, %30 : vector<8x8xf32>
    %c0_10 = arith.constant 0 : index
    %c0_11 = arith.constant 0 : index
    %c2_12 = arith.constant 2 : index
    %c0_13 = arith.constant 0 : index
    %c0_14 = arith.constant 0 : index
    %32 = vector.load %arg2[%c0_10, %c0_11, %c2_12, %c0_13, %c0_14] : memref<1x1x16x9x9xf32, #tpu.memory_space<vmem>>, vector<1x1x1x8x8xf32>
    %33 = vector.shape_cast %32 : vector<1x1x1x8x8xf32> to vector<8x8xf32>
    %c8 = arith.constant 8 : index
    %34 = memref.load %arg3[%c8] : memref<144xf32, #tpu.memory_space<smem>>
    %35 = vector.broadcast %34 : f32 to vector<8x8xf32>
    %36 = arith.mulf %35, %33 : vector<8x8xf32>
    %37 = arith.addf %19, %36 : vector<8x8xf32>
    %c9 = arith.constant 9 : index
    %38 = memref.load %arg3[%c9] : memref<144xf32, #tpu.memory_space<smem>>
    %39 = vector.broadcast %38 : f32 to vector<8x8xf32>
    %40 = arith.mulf %39, %33 : vector<8x8xf32>
    %41 = arith.addf %23, %40 : vector<8x8xf32>
    %c10 = arith.constant 10 : index
    %42 = memref.load %arg3[%c10] : memref<144xf32, #tpu.memory_space<smem>>
    %43 = vector.broadcast %42 : f32 to vector<8x8xf32>
    %44 = arith.mulf %43, %33 : vector<8x8xf32>
    %45 = arith.addf %27, %44 : vector<8x8xf32>
    %c11 = arith.constant 11 : index
    %46 = memref.load %arg3[%c11] : memref<144xf32, #tpu.memory_space<smem>>
    %47 = vector.broadcast %46 : f32 to vector<8x8xf32>
    %48 = arith.mulf %47, %33 : vector<8x8xf32>
    %49 = arith.addf %31, %48 : vector<8x8xf32>
    %c0_15 = arith.constant 0 : index
    %c0_16 = arith.constant 0 : index
    %c3_17 = arith.constant 3 : index
    %c0_18 = arith.constant 0 : index
    %c0_19 = arith.constant 0 : index
    %50 = vector.load %arg2[%c0_15, %c0_16, %c3_17, %c0_18, %c0_19] : memref<1x1x16x9x9xf32, #tpu.memory_space<vmem>>, vector<1x1x1x8x8xf32>
    %51 = vector.shape_cast %50 : vector<1x1x1x8x8xf32> to vector<8x8xf32>
    %c12 = arith.constant 12 : index
    %52 = memref.load %arg3[%c12] : memref<144xf32, #tpu.memory_space<smem>>
    %53 = vector.broadcast %52 : f32 to vector<8x8xf32>
    %54 = arith.mulf %53, %51 : vector<8x8xf32>
    %55 = arith.addf %37, %54 : vector<8x8xf32>
    %c13 = arith.constant 13 : index
    %56 = memref.load %arg3[%c13] : memref<144xf32, #tpu.memory_space<smem>>
    %57 = vector.broadcast %56 : f32 to vector<8x8xf32>
    %58 = arith.mulf %57, %51 : vector<8x8xf32>
    %59 = arith.addf %41, %58 : vector<8x8xf32>
    %c14 = arith.constant 14 : index
    %60 = memref.load %arg3[%c14] : memref<144xf32, #tpu.memory_space<smem>>
    %61 = vector.broadcast %60 : f32 to vector<8x8xf32>
    %62 = arith.mulf %61, %51 : vector<8x8xf32>
    %63 = arith.addf %45, %62 : vector<8x8xf32>
    %c15 = arith.constant 15 : index
    %64 = memref.load %arg3[%c15] : memref<144xf32, #tpu.memory_space<smem>>
    %65 = vector.broadcast %64 : f32 to vector<8x8xf32>
    %66 = arith.mulf %65, %51 : vector<8x8xf32>
    %67 = arith.addf %49, %66 : vector<8x8xf32>
    %c0_20 = arith.constant 0 : index
    %c0_21 = arith.constant 0 : index
    %c4_22 = arith.constant 4 : index
    %c0_23 = arith.constant 0 : index
    %c0_24 = arith.constant 0 : index
    %68 = vector.load %arg2[%c0_20, %c0_21, %c4_22, %c0_23, %c0_24] : memref<1x1x16x9x9xf32, #tpu.memory_space<vmem>>, vector<1x1x1x8x8xf32>
    %69 = vector.shape_cast %68 : vector<1x1x1x8x8xf32> to vector<8x8xf32>
    %c16 = arith.constant 16 : index
    %70 = memref.load %arg3[%c16] : memref<144xf32, #tpu.memory_space<smem>>
    %71 = vector.broadcast %70 : f32 to vector<8x8xf32>
    %72 = arith.mulf %71, %69 : vector<8x8xf32>
    %73 = arith.addf %55, %72 : vector<8x8xf32>
    %c17 = arith.constant 17 : index
    %74 = memref.load %arg3[%c17] : memref<144xf32, #tpu.memory_space<smem>>
    %75 = vector.broadcast %74 : f32 to vector<8x8xf32>
    %76 = arith.mulf %75, %69 : vector<8x8xf32>
    %77 = arith.addf %59, %76 : vector<8x8xf32>
    %c18 = arith.constant 18 : index
    %78 = memref.load %arg3[%c18] : memref<144xf32, #tpu.memory_space<smem>>
    %79 = vector.broadcast %78 : f32 to vector<8x8xf32>
    %80 = arith.mulf %79, %69 : vector<8x8xf32>
    %81 = arith.addf %63, %80 : vector<8x8xf32>
    %c19 = arith.constant 19 : index
    %82 = memref.load %arg3[%c19] : memref<144xf32, #tpu.memory_space<smem>>
    %83 = vector.broadcast %82 : f32 to vector<8x8xf32>
    %84 = arith.mulf %83, %69 : vector<8x8xf32>
    %85 = arith.addf %67, %84 : vector<8x8xf32>
    %c0_25 = arith.constant 0 : index
    %c0_26 = arith.constant 0 : index
    %c5_27 = arith.constant 5 : index
    %c0_28 = arith.constant 0 : index
    %c0_29 = arith.constant 0 : index
    %86 = vector.load %arg2[%c0_25, %c0_26, %c5_27, %c0_28, %c0_29] : memref<1x1x16x9x9xf32, #tpu.memory_space<vmem>>, vector<1x1x1x8x8xf32>
    %87 = vector.shape_cast %86 : vector<1x1x1x8x8xf32> to vector<8x8xf32>
    %c20 = arith.constant 20 : index
    %88 = memref.load %arg3[%c20] : memref<144xf32, #tpu.memory_space<smem>>
    %89 = vector.broadcast %88 : f32 to vector<8x8xf32>
    %90 = arith.mulf %89, %87 : vector<8x8xf32>
    %91 = arith.addf %73, %90 : vector<8x8xf32>
    %c21 = arith.constant 21 : index
    %92 = memref.load %arg3[%c21] : memref<144xf32, #tpu.memory_space<smem>>
    %93 = vector.broadcast %92 : f32 to vector<8x8xf32>
    %94 = arith.mulf %93, %87 : vector<8x8xf32>
    %95 = arith.addf %77, %94 : vector<8x8xf32>
    %c22 = arith.constant 22 : index
    %96 = memref.load %arg3[%c22] : memref<144xf32, #tpu.memory_space<smem>>
    %97 = vector.broadcast %96 : f32 to vector<8x8xf32>
    %98 = arith.mulf %97, %87 : vector<8x8xf32>
    %99 = arith.addf %81, %98 : vector<8x8xf32>
    %c23 = arith.constant 23 : index
    %100 = memref.load %arg3[%c23] : memref<144xf32, #tpu.memory_space<smem>>
    %101 = vector.broadcast %100 : f32 to vector<8x8xf32>
    %102 = arith.mulf %101, %87 : vector<8x8xf32>
    %103 = arith.addf %85, %102 : vector<8x8xf32>
    %c0_30 = arith.constant 0 : index
    %c0_31 = arith.constant 0 : index
    %c6_32 = arith.constant 6 : index
    %c0_33 = arith.constant 0 : index
    %c0_34 = arith.constant 0 : index
    %104 = vector.load %arg2[%c0_30, %c0_31, %c6_32, %c0_33, %c0_34] : memref<1x1x16x9x9xf32, #tpu.memory_space<vmem>>, vector<1x1x1x8x8xf32>
    %105 = vector.shape_cast %104 : vector<1x1x1x8x8xf32> to vector<8x8xf32>
    %c24 = arith.constant 24 : index
    %106 = memref.load %arg3[%c24] : memref<144xf32, #tpu.memory_space<smem>>
    %107 = vector.broadcast %106 : f32 to vector<8x8xf32>
    %108 = arith.mulf %107, %105 : vector<8x8xf32>
    %109 = arith.addf %91, %108 : vector<8x8xf32>
    %c25 = arith.constant 25 : index
    %110 = memref.load %arg3[%c25] : memref<144xf32, #tpu.memory_space<smem>>
    %111 = vector.broadcast %110 : f32 to vector<8x8xf32>
    %112 = arith.mulf %111, %105 : vector<8x8xf32>
    %113 = arith.addf %95, %112 : vector<8x8xf32>
    %c26 = arith.constant 26 : index
    %114 = memref.load %arg3[%c26] : memref<144xf32, #tpu.memory_space<smem>>
    %115 = vector.broadcast %114 : f32 to vector<8x8xf32>
    %116 = arith.mulf %115, %105 : vector<8x8xf32>
    %117 = arith.addf %99, %116 : vector<8x8xf32>
    %c27 = arith.constant 27 : index
    %118 = memref.load %arg3[%c27] : memref<144xf32, #tpu.memory_space<smem>>
    %119 = vector.broadcast %118 : f32 to vector<8x8xf32>
    %120 = arith.mulf %119, %105 : vector<8x8xf32>
    %121 = arith.addf %103, %120 : vector<8x8xf32>
    %c0_35 = arith.constant 0 : index
    %c0_36 = arith.constant 0 : index
    %c7_37 = arith.constant 7 : index
    %c0_38 = arith.constant 0 : index
    %c0_39 = arith.constant 0 : index
    %122 = vector.load %arg2[%c0_35, %c0_36, %c7_37, %c0_38, %c0_39] : memref<1x1x16x9x9xf32, #tpu.memory_space<vmem>>, vector<1x1x1x8x8xf32>
    %123 = vector.shape_cast %122 : vector<1x1x1x8x8xf32> to vector<8x8xf32>
    %c28 = arith.constant 28 : index
    %124 = memref.load %arg3[%c28] : memref<144xf32, #tpu.memory_space<smem>>
    %125 = vector.broadcast %124 : f32 to vector<8x8xf32>
    %126 = arith.mulf %125, %123 : vector<8x8xf32>
    %127 = arith.addf %109, %126 : vector<8x8xf32>
    %c29 = arith.constant 29 : index
    %128 = memref.load %arg3[%c29] : memref<144xf32, #tpu.memory_space<smem>>
    %129 = vector.broadcast %128 : f32 to vector<8x8xf32>
    %130 = arith.mulf %129, %123 : vector<8x8xf32>
    %131 = arith.addf %113, %130 : vector<8x8xf32>
    %c30 = arith.constant 30 : index
    %132 = memref.load %arg3[%c30] : memref<144xf32, #tpu.memory_space<smem>>
    %133 = vector.broadcast %132 : f32 to vector<8x8xf32>
    %134 = arith.mulf %133, %123 : vector<8x8xf32>
    %135 = arith.addf %117, %134 : vector<8x8xf32>
    %c31 = arith.constant 31 : index
    %136 = memref.load %arg3[%c31] : memref<144xf32, #tpu.memory_space<smem>>
    %137 = vector.broadcast %136 : f32 to vector<8x8xf32>
    %138 = arith.mulf %137, %123 : vector<8x8xf32>
    %139 = arith.addf %121, %138 : vector<8x8xf32>
    %c0_40 = arith.constant 0 : index
    %c0_41 = arith.constant 0 : index
    %c0_42 = arith.constant 0 : index
    %c0_43 = arith.constant 0 : index
    %c1_44 = arith.constant 1 : index
    %140 = vector.load %arg2[%c0_40, %c0_41, %c0_42, %c0_43, %c1_44] : memref<1x1x16x9x9xf32, #tpu.memory_space<vmem>>, vector<1x1x1x8x8xf32>
    %141 = vector.shape_cast %140 : vector<1x1x1x8x8xf32> to vector<8x8xf32>
    %c32 = arith.constant 32 : index
    %142 = memref.load %arg3[%c32] : memref<144xf32, #tpu.memory_space<smem>>
    %143 = vector.broadcast %142 : f32 to vector<8x8xf32>
    %144 = arith.mulf %143, %141 : vector<8x8xf32>
    %145 = arith.addf %127, %144 : vector<8x8xf32>
    %c33 = arith.constant 33 : index
    %146 = memref.load %arg3[%c33] : memref<144xf32, #tpu.memory_space<smem>>
    %147 = vector.broadcast %146 : f32 to vector<8x8xf32>
    %148 = arith.mulf %147, %141 : vector<8x8xf32>
    %149 = arith.addf %131, %148 : vector<8x8xf32>
    %c34 = arith.constant 34 : index
    %150 = memref.load %arg3[%c34] : memref<144xf32, #tpu.memory_space<smem>>
    %151 = vector.broadcast %150 : f32 to vector<8x8xf32>
    %152 = arith.mulf %151, %141 : vector<8x8xf32>
    %153 = arith.addf %135, %152 : vector<8x8xf32>
    %c35 = arith.constant 35 : index
    %154 = memref.load %arg3[%c35] : memref<144xf32, #tpu.memory_space<smem>>
    %155 = vector.broadcast %154 : f32 to vector<8x8xf32>
    %156 = arith.mulf %155, %141 : vector<8x8xf32>
    %157 = arith.addf %139, %156 : vector<8x8xf32>
    %c0_45 = arith.constant 0 : index
    %c0_46 = arith.constant 0 : index
    %c1_47 = arith.constant 1 : index
    %c0_48 = arith.constant 0 : index
    %c1_49 = arith.constant 1 : index
    %158 = vector.load %arg2[%c0_45, %c0_46, %c1_47, %c0_48, %c1_49] : memref<1x1x16x9x9xf32, #tpu.memory_space<vmem>>, vector<1x1x1x8x8xf32>
    %159 = vector.shape_cast %158 : vector<1x1x1x8x8xf32> to vector<8x8xf32>
    %c36 = arith.constant 36 : index
    %160 = memref.load %arg3[%c36] : memref<144xf32, #tpu.memory_space<smem>>
    %161 = vector.broadcast %160 : f32 to vector<8x8xf32>
    %162 = arith.mulf %161, %159 : vector<8x8xf32>
    %163 = arith.addf %145, %162 : vector<8x8xf32>
    %c37 = arith.constant 37 : index
    %164 = memref.load %arg3[%c37] : memref<144xf32, #tpu.memory_space<smem>>
    %165 = vector.broadcast %164 : f32 to vector<8x8xf32>
    %166 = arith.mulf %165, %159 : vector<8x8xf32>
    %167 = arith.addf %149, %166 : vector<8x8xf32>
    %c38 = arith.constant 38 : index
    %168 = memref.load %arg3[%c38] : memref<144xf32, #tpu.memory_space<smem>>
    %169 = vector.broadcast %168 : f32 to vector<8x8xf32>
    %170 = arith.mulf %169, %159 : vector<8x8xf32>
    %171 = arith.addf %153, %170 : vector<8x8xf32>
    %c39 = arith.constant 39 : index
    %172 = memref.load %arg3[%c39] : memref<144xf32, #tpu.memory_space<smem>>
    %173 = vector.broadcast %172 : f32 to vector<8x8xf32>
    %174 = arith.mulf %173, %159 : vector<8x8xf32>
    %175 = arith.addf %157, %174 : vector<8x8xf32>
    %c0_50 = arith.constant 0 : index
    %c0_51 = arith.constant 0 : index
    %c2_52 = arith.constant 2 : index
    %c0_53 = arith.constant 0 : index
    %c1_54 = arith.constant 1 : index
    %176 = vector.load %arg2[%c0_50, %c0_51, %c2_52, %c0_53, %c1_54] : memref<1x1x16x9x9xf32, #tpu.memory_space<vmem>>, vector<1x1x1x8x8xf32>
    %177 = vector.shape_cast %176 : vector<1x1x1x8x8xf32> to vector<8x8xf32>
    %c40 = arith.constant 40 : index
    %178 = memref.load %arg3[%c40] : memref<144xf32, #tpu.memory_space<smem>>
    %179 = vector.broadcast %178 : f32 to vector<8x8xf32>
    %180 = arith.mulf %179, %177 : vector<8x8xf32>
    %181 = arith.addf %163, %180 : vector<8x8xf32>
    %c41 = arith.constant 41 : index
    %182 = memref.load %arg3[%c41] : memref<144xf32, #tpu.memory_space<smem>>
    %183 = vector.broadcast %182 : f32 to vector<8x8xf32>
    %184 = arith.mulf %183, %177 : vector<8x8xf32>
    %185 = arith.addf %167, %184 : vector<8x8xf32>
    %c42 = arith.constant 42 : index
    %186 = memref.load %arg3[%c42] : memref<144xf32, #tpu.memory_space<smem>>
    %187 = vector.broadcast %186 : f32 to vector<8x8xf32>
    %188 = arith.mulf %187, %177 : vector<8x8xf32>
    %189 = arith.addf %171, %188 : vector<8x8xf32>
    %c43 = arith.constant 43 : index
    %190 = memref.load %arg3[%c43] : memref<144xf32, #tpu.memory_space<smem>>
    %191 = vector.broadcast %190 : f32 to vector<8x8xf32>
    %192 = arith.mulf %191, %177 : vector<8x8xf32>
    %193 = arith.addf %175, %192 : vector<8x8xf32>
    %c0_55 = arith.constant 0 : index
    %c0_56 = arith.constant 0 : index
    %c3_57 = arith.constant 3 : index
    %c0_58 = arith.constant 0 : index
    %c1_59 = arith.constant 1 : index
    %194 = vector.load %arg2[%c0_55, %c0_56, %c3_57, %c0_58, %c1_59] : memref<1x1x16x9x9xf32, #tpu.memory_space<vmem>>, vector<1x1x1x8x8xf32>
    %195 = vector.shape_cast %194 : vector<1x1x1x8x8xf32> to vector<8x8xf32>
    %c44 = arith.constant 44 : index
    %196 = memref.load %arg3[%c44] : memref<144xf32, #tpu.memory_space<smem>>
    %197 = vector.broadcast %196 : f32 to vector<8x8xf32>
    %198 = arith.mulf %197, %195 : vector<8x8xf32>
    %199 = arith.addf %181, %198 : vector<8x8xf32>
    %c45 = arith.constant 45 : index
    %200 = memref.load %arg3[%c45] : memref<144xf32, #tpu.memory_space<smem>>
    %201 = vector.broadcast %200 : f32 to vector<8x8xf32>
    %202 = arith.mulf %201, %195 : vector<8x8xf32>
    %203 = arith.addf %185, %202 : vector<8x8xf32>
    %c46 = arith.constant 46 : index
    %204 = memref.load %arg3[%c46] : memref<144xf32, #tpu.memory_space<smem>>
    %205 = vector.broadcast %204 : f32 to vector<8x8xf32>
    %206 = arith.mulf %205, %195 : vector<8x8xf32>
    %207 = arith.addf %189, %206 : vector<8x8xf32>
    %c47 = arith.constant 47 : index
    %208 = memref.load %arg3[%c47] : memref<144xf32, #tpu.memory_space<smem>>
    %209 = vector.broadcast %208 : f32 to vector<8x8xf32>
    %210 = arith.mulf %209, %195 : vector<8x8xf32>
    %211 = arith.addf %193, %210 : vector<8x8xf32>
    %c0_60 = arith.constant 0 : index
    %c0_61 = arith.constant 0 : index
    %c8_62 = arith.constant 8 : index
    %c0_63 = arith.constant 0 : index
    %c0_64 = arith.constant 0 : index
    %212 = vector.load %arg2[%c0_60, %c0_61, %c8_62, %c0_63, %c0_64] : memref<1x1x16x9x9xf32, #tpu.memory_space<vmem>>, vector<1x1x1x8x8xf32>
    %213 = vector.shape_cast %212 : vector<1x1x1x8x8xf32> to vector<8x8xf32>
    %c48 = arith.constant 48 : index
    %214 = memref.load %arg3[%c48] : memref<144xf32, #tpu.memory_space<smem>>
    %215 = vector.broadcast %214 : f32 to vector<8x8xf32>
    %216 = arith.mulf %215, %213 : vector<8x8xf32>
    %217 = arith.addf %199, %216 : vector<8x8xf32>
    %c49 = arith.constant 49 : index
    %218 = memref.load %arg3[%c49] : memref<144xf32, #tpu.memory_space<smem>>
    %219 = vector.broadcast %218 : f32 to vector<8x8xf32>
    %220 = arith.mulf %219, %213 : vector<8x8xf32>
    %221 = arith.addf %203, %220 : vector<8x8xf32>
    %c50 = arith.constant 50 : index
    %222 = memref.load %arg3[%c50] : memref<144xf32, #tpu.memory_space<smem>>
    %223 = vector.broadcast %222 : f32 to vector<8x8xf32>
    %224 = arith.mulf %223, %213 : vector<8x8xf32>
    %225 = arith.addf %207, %224 : vector<8x8xf32>
    %c51 = arith.constant 51 : index
    %226 = memref.load %arg3[%c51] : memref<144xf32, #tpu.memory_space<smem>>
    %227 = vector.broadcast %226 : f32 to vector<8x8xf32>
    %228 = arith.mulf %227, %213 : vector<8x8xf32>
    %229 = arith.addf %211, %228 : vector<8x8xf32>
    %c0_65 = arith.constant 0 : index
    %c0_66 = arith.constant 0 : index
    %c9_67 = arith.constant 9 : index
    %c0_68 = arith.constant 0 : index
    %c0_69 = arith.constant 0 : index
    %230 = vector.load %arg2[%c0_65, %c0_66, %c9_67, %c0_68, %c0_69] : memref<1x1x16x9x9xf32, #tpu.memory_space<vmem>>, vector<1x1x1x8x8xf32>
    %231 = vector.shape_cast %230 : vector<1x1x1x8x8xf32> to vector<8x8xf32>
    %c52 = arith.constant 52 : index
    %232 = memref.load %arg3[%c52] : memref<144xf32, #tpu.memory_space<smem>>
    %233 = vector.broadcast %232 : f32 to vector<8x8xf32>
    %234 = arith.mulf %233, %231 : vector<8x8xf32>
    %235 = arith.addf %217, %234 : vector<8x8xf32>
    %c53 = arith.constant 53 : index
    %236 = memref.load %arg3[%c53] : memref<144xf32, #tpu.memory_space<smem>>
    %237 = vector.broadcast %236 : f32 to vector<8x8xf32>
    %238 = arith.mulf %237, %231 : vector<8x8xf32>
    %239 = arith.addf %221, %238 : vector<8x8xf32>
    %c54 = arith.constant 54 : index
    %240 = memref.load %arg3[%c54] : memref<144xf32, #tpu.memory_space<smem>>
    %241 = vector.broadcast %240 : f32 to vector<8x8xf32>
    %242 = arith.mulf %241, %231 : vector<8x8xf32>
    %243 = arith.addf %225, %242 : vector<8x8xf32>
    %c55 = arith.constant 55 : index
    %244 = memref.load %arg3[%c55] : memref<144xf32, #tpu.memory_space<smem>>
    %245 = vector.broadcast %244 : f32 to vector<8x8xf32>
    %246 = arith.mulf %245, %231 : vector<8x8xf32>
    %247 = arith.addf %229, %246 : vector<8x8xf32>
    %c0_70 = arith.constant 0 : index
    %c0_71 = arith.constant 0 : index
    %c10_72 = arith.constant 10 : index
    %c0_73 = arith.constant 0 : index
    %c0_74 = arith.constant 0 : index
    %248 = vector.load %arg2[%c0_70, %c0_71, %c10_72, %c0_73, %c0_74] : memref<1x1x16x9x9xf32, #tpu.memory_space<vmem>>, vector<1x1x1x8x8xf32>
    %249 = vector.shape_cast %248 : vector<1x1x1x8x8xf32> to vector<8x8xf32>
    %c56 = arith.constant 56 : index
    %250 = memref.load %arg3[%c56] : memref<144xf32, #tpu.memory_space<smem>>
    %251 = vector.broadcast %250 : f32 to vector<8x8xf32>
    %252 = arith.mulf %251, %249 : vector<8x8xf32>
    %253 = arith.addf %235, %252 : vector<8x8xf32>
    %c57 = arith.constant 57 : index
    %254 = memref.load %arg3[%c57] : memref<144xf32, #tpu.memory_space<smem>>
    %255 = vector.broadcast %254 : f32 to vector<8x8xf32>
    %256 = arith.mulf %255, %249 : vector<8x8xf32>
    %257 = arith.addf %239, %256 : vector<8x8xf32>
    %c58 = arith.constant 58 : index
    %258 = memref.load %arg3[%c58] : memref<144xf32, #tpu.memory_space<smem>>
    %259 = vector.broadcast %258 : f32 to vector<8x8xf32>
    %260 = arith.mulf %259, %249 : vector<8x8xf32>
    %261 = arith.addf %243, %260 : vector<8x8xf32>
    %c59 = arith.constant 59 : index
    %262 = memref.load %arg3[%c59] : memref<144xf32, #tpu.memory_space<smem>>
    %263 = vector.broadcast %262 : f32 to vector<8x8xf32>
    %264 = arith.mulf %263, %249 : vector<8x8xf32>
    %265 = arith.addf %247, %264 : vector<8x8xf32>
    %c0_75 = arith.constant 0 : index
    %c0_76 = arith.constant 0 : index
    %c11_77 = arith.constant 11 : index
    %c0_78 = arith.constant 0 : index
    %c0_79 = arith.constant 0 : index
    %266 = vector.load %arg2[%c0_75, %c0_76, %c11_77, %c0_78, %c0_79] : memref<1x1x16x9x9xf32, #tpu.memory_space<vmem>>, vector<1x1x1x8x8xf32>
    %267 = vector.shape_cast %266 : vector<1x1x1x8x8xf32> to vector<8x8xf32>
    %c60 = arith.constant 60 : index
    %268 = memref.load %arg3[%c60] : memref<144xf32, #tpu.memory_space<smem>>
    %269 = vector.broadcast %268 : f32 to vector<8x8xf32>
    %270 = arith.mulf %269, %267 : vector<8x8xf32>
    %271 = arith.addf %253, %270 : vector<8x8xf32>
    %c61 = arith.constant 61 : index
    %272 = memref.load %arg3[%c61] : memref<144xf32, #tpu.memory_space<smem>>
    %273 = vector.broadcast %272 : f32 to vector<8x8xf32>
    %274 = arith.mulf %273, %267 : vector<8x8xf32>
    %275 = arith.addf %257, %274 : vector<8x8xf32>
    %c62 = arith.constant 62 : index
    %276 = memref.load %arg3[%c62] : memref<144xf32, #tpu.memory_space<smem>>
    %277 = vector.broadcast %276 : f32 to vector<8x8xf32>
    %278 = arith.mulf %277, %267 : vector<8x8xf32>
    %279 = arith.addf %261, %278 : vector<8x8xf32>
    %c63 = arith.constant 63 : index
    %280 = memref.load %arg3[%c63] : memref<144xf32, #tpu.memory_space<smem>>
    %281 = vector.broadcast %280 : f32 to vector<8x8xf32>
    %282 = arith.mulf %281, %267 : vector<8x8xf32>
    %283 = arith.addf %265, %282 : vector<8x8xf32>
    %c0_80 = arith.constant 0 : index
    %c0_81 = arith.constant 0 : index
    %c12_82 = arith.constant 12 : index
    %c0_83 = arith.constant 0 : index
    %c0_84 = arith.constant 0 : index
    %284 = vector.load %arg2[%c0_80, %c0_81, %c12_82, %c0_83, %c0_84] : memref<1x1x16x9x9xf32, #tpu.memory_space<vmem>>, vector<1x1x1x8x8xf32>
    %285 = vector.shape_cast %284 : vector<1x1x1x8x8xf32> to vector<8x8xf32>
    %c64 = arith.constant 64 : index
    %286 = memref.load %arg3[%c64] : memref<144xf32, #tpu.memory_space<smem>>
    %287 = vector.broadcast %286 : f32 to vector<8x8xf32>
    %288 = arith.mulf %287, %285 : vector<8x8xf32>
    %289 = arith.addf %271, %288 : vector<8x8xf32>
    %c65 = arith.constant 65 : index
    %290 = memref.load %arg3[%c65] : memref<144xf32, #tpu.memory_space<smem>>
    %291 = vector.broadcast %290 : f32 to vector<8x8xf32>
    %292 = arith.mulf %291, %285 : vector<8x8xf32>
    %293 = arith.addf %275, %292 : vector<8x8xf32>
    %c66 = arith.constant 66 : index
    %294 = memref.load %arg3[%c66] : memref<144xf32, #tpu.memory_space<smem>>
    %295 = vector.broadcast %294 : f32 to vector<8x8xf32>
    %296 = arith.mulf %295, %285 : vector<8x8xf32>
    %297 = arith.addf %279, %296 : vector<8x8xf32>
    %c67 = arith.constant 67 : index
    %298 = memref.load %arg3[%c67] : memref<144xf32, #tpu.memory_space<smem>>
    %299 = vector.broadcast %298 : f32 to vector<8x8xf32>
    %300 = arith.mulf %299, %285 : vector<8x8xf32>
    %301 = arith.addf %283, %300 : vector<8x8xf32>
    %c0_85 = arith.constant 0 : index
    %c0_86 = arith.constant 0 : index
    %c13_87 = arith.constant 13 : index
    %c0_88 = arith.constant 0 : index
    %c0_89 = arith.constant 0 : index
    %302 = vector.load %arg2[%c0_85, %c0_86, %c13_87, %c0_88, %c0_89] : memref<1x1x16x9x9xf32, #tpu.memory_space<vmem>>, vector<1x1x1x8x8xf32>
    %303 = vector.shape_cast %302 : vector<1x1x1x8x8xf32> to vector<8x8xf32>
    %c68 = arith.constant 68 : index
    %304 = memref.load %arg3[%c68] : memref<144xf32, #tpu.memory_space<smem>>
    %305 = vector.broadcast %304 : f32 to vector<8x8xf32>
    %306 = arith.mulf %305, %303 : vector<8x8xf32>
    %307 = arith.addf %289, %306 : vector<8x8xf32>
    %c69 = arith.constant 69 : index
    %308 = memref.load %arg3[%c69] : memref<144xf32, #tpu.memory_space<smem>>
    %309 = vector.broadcast %308 : f32 to vector<8x8xf32>
    %310 = arith.mulf %309, %303 : vector<8x8xf32>
    %311 = arith.addf %293, %310 : vector<8x8xf32>
    %c70 = arith.constant 70 : index
    %312 = memref.load %arg3[%c70] : memref<144xf32, #tpu.memory_space<smem>>
    %313 = vector.broadcast %312 : f32 to vector<8x8xf32>
    %314 = arith.mulf %313, %303 : vector<8x8xf32>
    %315 = arith.addf %297, %314 : vector<8x8xf32>
    %c71 = arith.constant 71 : index
    %316 = memref.load %arg3[%c71] : memref<144xf32, #tpu.memory_space<smem>>
    %317 = vector.broadcast %316 : f32 to vector<8x8xf32>
    %318 = arith.mulf %317, %303 : vector<8x8xf32>
    %319 = arith.addf %301, %318 : vector<8x8xf32>
    %c0_90 = arith.constant 0 : index
    %c0_91 = arith.constant 0 : index
    %c14_92 = arith.constant 14 : index
    %c0_93 = arith.constant 0 : index
    %c0_94 = arith.constant 0 : index
    %320 = vector.load %arg2[%c0_90, %c0_91, %c14_92, %c0_93, %c0_94] : memref<1x1x16x9x9xf32, #tpu.memory_space<vmem>>, vector<1x1x1x8x8xf32>
    %321 = vector.shape_cast %320 : vector<1x1x1x8x8xf32> to vector<8x8xf32>
    %c72 = arith.constant 72 : index
    %322 = memref.load %arg3[%c72] : memref<144xf32, #tpu.memory_space<smem>>
    %323 = vector.broadcast %322 : f32 to vector<8x8xf32>
    %324 = arith.mulf %323, %321 : vector<8x8xf32>
    %325 = arith.addf %307, %324 : vector<8x8xf32>
    %c73 = arith.constant 73 : index
    %326 = memref.load %arg3[%c73] : memref<144xf32, #tpu.memory_space<smem>>
    %327 = vector.broadcast %326 : f32 to vector<8x8xf32>
    %328 = arith.mulf %327, %321 : vector<8x8xf32>
    %329 = arith.addf %311, %328 : vector<8x8xf32>
    %c74 = arith.constant 74 : index
    %330 = memref.load %arg3[%c74] : memref<144xf32, #tpu.memory_space<smem>>
    %331 = vector.broadcast %330 : f32 to vector<8x8xf32>
    %332 = arith.mulf %331, %321 : vector<8x8xf32>
    %333 = arith.addf %315, %332 : vector<8x8xf32>
    %c75 = arith.constant 75 : index
    %334 = memref.load %arg3[%c75] : memref<144xf32, #tpu.memory_space<smem>>
    %335 = vector.broadcast %334 : f32 to vector<8x8xf32>
    %336 = arith.mulf %335, %321 : vector<8x8xf32>
    %337 = arith.addf %319, %336 : vector<8x8xf32>
    %c0_95 = arith.constant 0 : index
    %c0_96 = arith.constant 0 : index
    %c15_97 = arith.constant 15 : index
    %c0_98 = arith.constant 0 : index
    %c0_99 = arith.constant 0 : index
    %338 = vector.load %arg2[%c0_95, %c0_96, %c15_97, %c0_98, %c0_99] : memref<1x1x16x9x9xf32, #tpu.memory_space<vmem>>, vector<1x1x1x8x8xf32>
    %339 = vector.shape_cast %338 : vector<1x1x1x8x8xf32> to vector<8x8xf32>
    %c76 = arith.constant 76 : index
    %340 = memref.load %arg3[%c76] : memref<144xf32, #tpu.memory_space<smem>>
    %341 = vector.broadcast %340 : f32 to vector<8x8xf32>
    %342 = arith.mulf %341, %339 : vector<8x8xf32>
    %343 = arith.addf %325, %342 : vector<8x8xf32>
    %c77 = arith.constant 77 : index
    %344 = memref.load %arg3[%c77] : memref<144xf32, #tpu.memory_space<smem>>
    %345 = vector.broadcast %344 : f32 to vector<8x8xf32>
    %346 = arith.mulf %345, %339 : vector<8x8xf32>
    %347 = arith.addf %329, %346 : vector<8x8xf32>
    %c78 = arith.constant 78 : index
    %348 = memref.load %arg3[%c78] : memref<144xf32, #tpu.memory_space<smem>>
    %349 = vector.broadcast %348 : f32 to vector<8x8xf32>
    %350 = arith.mulf %349, %339 : vector<8x8xf32>
    %351 = arith.addf %333, %350 : vector<8x8xf32>
    %c79 = arith.constant 79 : index
    %352 = memref.load %arg3[%c79] : memref<144xf32, #tpu.memory_space<smem>>
    %353 = vector.broadcast %352 : f32 to vector<8x8xf32>
    %354 = arith.mulf %353, %339 : vector<8x8xf32>
    %355 = arith.addf %337, %354 : vector<8x8xf32>
    %c0_100 = arith.constant 0 : index
    %c0_101 = arith.constant 0 : index
    %c8_102 = arith.constant 8 : index
    %c0_103 = arith.constant 0 : index
    %c1_104 = arith.constant 1 : index
    %356 = vector.load %arg2[%c0_100, %c0_101, %c8_102, %c0_103, %c1_104] : memref<1x1x16x9x9xf32, #tpu.memory_space<vmem>>, vector<1x1x1x8x8xf32>
    %357 = vector.shape_cast %356 : vector<1x1x1x8x8xf32> to vector<8x8xf32>
    %c80 = arith.constant 80 : index
    %358 = memref.load %arg3[%c80] : memref<144xf32, #tpu.memory_space<smem>>
    %359 = vector.broadcast %358 : f32 to vector<8x8xf32>
    %360 = arith.mulf %359, %357 : vector<8x8xf32>
    %361 = arith.addf %343, %360 : vector<8x8xf32>
    %c81 = arith.constant 81 : index
    %362 = memref.load %arg3[%c81] : memref<144xf32, #tpu.memory_space<smem>>
    %363 = vector.broadcast %362 : f32 to vector<8x8xf32>
    %364 = arith.mulf %363, %357 : vector<8x8xf32>
    %365 = arith.addf %347, %364 : vector<8x8xf32>
    %c82 = arith.constant 82 : index
    %366 = memref.load %arg3[%c82] : memref<144xf32, #tpu.memory_space<smem>>
    %367 = vector.broadcast %366 : f32 to vector<8x8xf32>
    %368 = arith.mulf %367, %357 : vector<8x8xf32>
    %369 = arith.addf %351, %368 : vector<8x8xf32>
    %c83 = arith.constant 83 : index
    %370 = memref.load %arg3[%c83] : memref<144xf32, #tpu.memory_space<smem>>
    %371 = vector.broadcast %370 : f32 to vector<8x8xf32>
    %372 = arith.mulf %371, %357 : vector<8x8xf32>
    %373 = arith.addf %355, %372 : vector<8x8xf32>
    %c0_105 = arith.constant 0 : index
    %c0_106 = arith.constant 0 : index
    %c9_107 = arith.constant 9 : index
    %c0_108 = arith.constant 0 : index
    %c1_109 = arith.constant 1 : index
    %374 = vector.load %arg2[%c0_105, %c0_106, %c9_107, %c0_108, %c1_109] : memref<1x1x16x9x9xf32, #tpu.memory_space<vmem>>, vector<1x1x1x8x8xf32>
    %375 = vector.shape_cast %374 : vector<1x1x1x8x8xf32> to vector<8x8xf32>
    %c84 = arith.constant 84 : index
    %376 = memref.load %arg3[%c84] : memref<144xf32, #tpu.memory_space<smem>>
    %377 = vector.broadcast %376 : f32 to vector<8x8xf32>
    %378 = arith.mulf %377, %375 : vector<8x8xf32>
    %379 = arith.addf %361, %378 : vector<8x8xf32>
    %c85 = arith.constant 85 : index
    %380 = memref.load %arg3[%c85] : memref<144xf32, #tpu.memory_space<smem>>
    %381 = vector.broadcast %380 : f32 to vector<8x8xf32>
    %382 = arith.mulf %381, %375 : vector<8x8xf32>
    %383 = arith.addf %365, %382 : vector<8x8xf32>
    %c86 = arith.constant 86 : index
    %384 = memref.load %arg3[%c86] : memref<144xf32, #tpu.memory_space<smem>>
    %385 = vector.broadcast %384 : f32 to vector<8x8xf32>
    %386 = arith.mulf %385, %375 : vector<8x8xf32>
    %387 = arith.addf %369, %386 : vector<8x8xf32>
    %c87 = arith.constant 87 : index
    %388 = memref.load %arg3[%c87] : memref<144xf32, #tpu.memory_space<smem>>
    %389 = vector.broadcast %388 : f32 to vector<8x8xf32>
    %390 = arith.mulf %389, %375 : vector<8x8xf32>
    %391 = arith.addf %373, %390 : vector<8x8xf32>
    %c0_110 = arith.constant 0 : index
    %c0_111 = arith.constant 0 : index
    %c10_112 = arith.constant 10 : index
    %c0_113 = arith.constant 0 : index
    %c1_114 = arith.constant 1 : index
    %392 = vector.load %arg2[%c0_110, %c0_111, %c10_112, %c0_113, %c1_114] : memref<1x1x16x9x9xf32, #tpu.memory_space<vmem>>, vector<1x1x1x8x8xf32>
    %393 = vector.shape_cast %392 : vector<1x1x1x8x8xf32> to vector<8x8xf32>
    %c88 = arith.constant 88 : index
    %394 = memref.load %arg3[%c88] : memref<144xf32, #tpu.memory_space<smem>>
    %395 = vector.broadcast %394 : f32 to vector<8x8xf32>
    %396 = arith.mulf %395, %393 : vector<8x8xf32>
    %397 = arith.addf %379, %396 : vector<8x8xf32>
    %c89 = arith.constant 89 : index
    %398 = memref.load %arg3[%c89] : memref<144xf32, #tpu.memory_space<smem>>
    %399 = vector.broadcast %398 : f32 to vector<8x8xf32>
    %400 = arith.mulf %399, %393 : vector<8x8xf32>
    %401 = arith.addf %383, %400 : vector<8x8xf32>
    %c90 = arith.constant 90 : index
    %402 = memref.load %arg3[%c90] : memref<144xf32, #tpu.memory_space<smem>>
    %403 = vector.broadcast %402 : f32 to vector<8x8xf32>
    %404 = arith.mulf %403, %393 : vector<8x8xf32>
    %405 = arith.addf %387, %404 : vector<8x8xf32>
    %c91 = arith.constant 91 : index
    %406 = memref.load %arg3[%c91] : memref<144xf32, #tpu.memory_space<smem>>
    %407 = vector.broadcast %406 : f32 to vector<8x8xf32>
    %408 = arith.mulf %407, %393 : vector<8x8xf32>
    %409 = arith.addf %391, %408 : vector<8x8xf32>
    %c0_115 = arith.constant 0 : index
    %c0_116 = arith.constant 0 : index
    %c11_117 = arith.constant 11 : index
    %c0_118 = arith.constant 0 : index
    %c1_119 = arith.constant 1 : index
    %410 = vector.load %arg2[%c0_115, %c0_116, %c11_117, %c0_118, %c1_119] : memref<1x1x16x9x9xf32, #tpu.memory_space<vmem>>, vector<1x1x1x8x8xf32>
    %411 = vector.shape_cast %410 : vector<1x1x1x8x8xf32> to vector<8x8xf32>
    %c92 = arith.constant 92 : index
    %412 = memref.load %arg3[%c92] : memref<144xf32, #tpu.memory_space<smem>>
    %413 = vector.broadcast %412 : f32 to vector<8x8xf32>
    %414 = arith.mulf %413, %411 : vector<8x8xf32>
    %415 = arith.addf %397, %414 : vector<8x8xf32>
    %c93 = arith.constant 93 : index
    %416 = memref.load %arg3[%c93] : memref<144xf32, #tpu.memory_space<smem>>
    %417 = vector.broadcast %416 : f32 to vector<8x8xf32>
    %418 = arith.mulf %417, %411 : vector<8x8xf32>
    %419 = arith.addf %401, %418 : vector<8x8xf32>
    %c94 = arith.constant 94 : index
    %420 = memref.load %arg3[%c94] : memref<144xf32, #tpu.memory_space<smem>>
    %421 = vector.broadcast %420 : f32 to vector<8x8xf32>
    %422 = arith.mulf %421, %411 : vector<8x8xf32>
    %423 = arith.addf %405, %422 : vector<8x8xf32>
    %c95 = arith.constant 95 : index
    %424 = memref.load %arg3[%c95] : memref<144xf32, #tpu.memory_space<smem>>
    %425 = vector.broadcast %424 : f32 to vector<8x8xf32>
    %426 = arith.mulf %425, %411 : vector<8x8xf32>
    %427 = arith.addf %409, %426 : vector<8x8xf32>
    %c0_120 = arith.constant 0 : index
    %c0_121 = arith.constant 0 : index
    %c0_122 = arith.constant 0 : index
    %c1_123 = arith.constant 1 : index
    %c0_124 = arith.constant 0 : index
    %428 = vector.load %arg2[%c0_120, %c0_121, %c0_122, %c1_123, %c0_124] : memref<1x1x16x9x9xf32, #tpu.memory_space<vmem>>, vector<1x1x1x8x8xf32>
    %429 = vector.shape_cast %428 : vector<1x1x1x8x8xf32> to vector<8x8xf32>
    %c96 = arith.constant 96 : index
    %430 = memref.load %arg3[%c96] : memref<144xf32, #tpu.memory_space<smem>>
    %431 = vector.broadcast %430 : f32 to vector<8x8xf32>
    %432 = arith.mulf %431, %429 : vector<8x8xf32>
    %433 = arith.addf %415, %432 : vector<8x8xf32>
    %c97 = arith.constant 97 : index
    %434 = memref.load %arg3[%c97] : memref<144xf32, #tpu.memory_space<smem>>
    %435 = vector.broadcast %434 : f32 to vector<8x8xf32>
    %436 = arith.mulf %435, %429 : vector<8x8xf32>
    %437 = arith.addf %419, %436 : vector<8x8xf32>
    %c98 = arith.constant 98 : index
    %438 = memref.load %arg3[%c98] : memref<144xf32, #tpu.memory_space<smem>>
    %439 = vector.broadcast %438 : f32 to vector<8x8xf32>
    %440 = arith.mulf %439, %429 : vector<8x8xf32>
    %441 = arith.addf %423, %440 : vector<8x8xf32>
    %c99 = arith.constant 99 : index
    %442 = memref.load %arg3[%c99] : memref<144xf32, #tpu.memory_space<smem>>
    %443 = vector.broadcast %442 : f32 to vector<8x8xf32>
    %444 = arith.mulf %443, %429 : vector<8x8xf32>
    %445 = arith.addf %427, %444 : vector<8x8xf32>
    %c0_125 = arith.constant 0 : index
    %c0_126 = arith.constant 0 : index
    %c1_127 = arith.constant 1 : index
    %c1_128 = arith.constant 1 : index
    %c0_129 = arith.constant 0 : index
    %446 = vector.load %arg2[%c0_125, %c0_126, %c1_127, %c1_128, %c0_129] : memref<1x1x16x9x9xf32, #tpu.memory_space<vmem>>, vector<1x1x1x8x8xf32>
    %447 = vector.shape_cast %446 : vector<1x1x1x8x8xf32> to vector<8x8xf32>
    %c100 = arith.constant 100 : index
    %448 = memref.load %arg3[%c100] : memref<144xf32, #tpu.memory_space<smem>>
    %449 = vector.broadcast %448 : f32 to vector<8x8xf32>
    %450 = arith.mulf %449, %447 : vector<8x8xf32>
    %451 = arith.addf %433, %450 : vector<8x8xf32>
    %c101 = arith.constant 101 : index
    %452 = memref.load %arg3[%c101] : memref<144xf32, #tpu.memory_space<smem>>
    %453 = vector.broadcast %452 : f32 to vector<8x8xf32>
    %454 = arith.mulf %453, %447 : vector<8x8xf32>
    %455 = arith.addf %437, %454 : vector<8x8xf32>
    %c102 = arith.constant 102 : index
    %456 = memref.load %arg3[%c102] : memref<144xf32, #tpu.memory_space<smem>>
    %457 = vector.broadcast %456 : f32 to vector<8x8xf32>
    %458 = arith.mulf %457, %447 : vector<8x8xf32>
    %459 = arith.addf %441, %458 : vector<8x8xf32>
    %c103 = arith.constant 103 : index
    %460 = memref.load %arg3[%c103] : memref<144xf32, #tpu.memory_space<smem>>
    %461 = vector.broadcast %460 : f32 to vector<8x8xf32>
    %462 = arith.mulf %461, %447 : vector<8x8xf32>
    %463 = arith.addf %445, %462 : vector<8x8xf32>
    %c0_130 = arith.constant 0 : index
    %c0_131 = arith.constant 0 : index
    %c2_132 = arith.constant 2 : index
    %c1_133 = arith.constant 1 : index
    %c0_134 = arith.constant 0 : index
    %464 = vector.load %arg2[%c0_130, %c0_131, %c2_132, %c1_133, %c0_134] : memref<1x1x16x9x9xf32, #tpu.memory_space<vmem>>, vector<1x1x1x8x8xf32>
    %465 = vector.shape_cast %464 : vector<1x1x1x8x8xf32> to vector<8x8xf32>
    %c104 = arith.constant 104 : index
    %466 = memref.load %arg3[%c104] : memref<144xf32, #tpu.memory_space<smem>>
    %467 = vector.broadcast %466 : f32 to vector<8x8xf32>
    %468 = arith.mulf %467, %465 : vector<8x8xf32>
    %469 = arith.addf %451, %468 : vector<8x8xf32>
    %c105 = arith.constant 105 : index
    %470 = memref.load %arg3[%c105] : memref<144xf32, #tpu.memory_space<smem>>
    %471 = vector.broadcast %470 : f32 to vector<8x8xf32>
    %472 = arith.mulf %471, %465 : vector<8x8xf32>
    %473 = arith.addf %455, %472 : vector<8x8xf32>
    %c106 = arith.constant 106 : index
    %474 = memref.load %arg3[%c106] : memref<144xf32, #tpu.memory_space<smem>>
    %475 = vector.broadcast %474 : f32 to vector<8x8xf32>
    %476 = arith.mulf %475, %465 : vector<8x8xf32>
    %477 = arith.addf %459, %476 : vector<8x8xf32>
    %c107 = arith.constant 107 : index
    %478 = memref.load %arg3[%c107] : memref<144xf32, #tpu.memory_space<smem>>
    %479 = vector.broadcast %478 : f32 to vector<8x8xf32>
    %480 = arith.mulf %479, %465 : vector<8x8xf32>
    %481 = arith.addf %463, %480 : vector<8x8xf32>
    %c0_135 = arith.constant 0 : index
    %c0_136 = arith.constant 0 : index
    %c3_137 = arith.constant 3 : index
    %c1_138 = arith.constant 1 : index
    %c0_139 = arith.constant 0 : index
    %482 = vector.load %arg2[%c0_135, %c0_136, %c3_137, %c1_138, %c0_139] : memref<1x1x16x9x9xf32, #tpu.memory_space<vmem>>, vector<1x1x1x8x8xf32>
    %483 = vector.shape_cast %482 : vector<1x1x1x8x8xf32> to vector<8x8xf32>
    %c108 = arith.constant 108 : index
    %484 = memref.load %arg3[%c108] : memref<144xf32, #tpu.memory_space<smem>>
    %485 = vector.broadcast %484 : f32 to vector<8x8xf32>
    %486 = arith.mulf %485, %483 : vector<8x8xf32>
    %487 = arith.addf %469, %486 : vector<8x8xf32>
    %c109 = arith.constant 109 : index
    %488 = memref.load %arg3[%c109] : memref<144xf32, #tpu.memory_space<smem>>
    %489 = vector.broadcast %488 : f32 to vector<8x8xf32>
    %490 = arith.mulf %489, %483 : vector<8x8xf32>
    %491 = arith.addf %473, %490 : vector<8x8xf32>
    %c110 = arith.constant 110 : index
    %492 = memref.load %arg3[%c110] : memref<144xf32, #tpu.memory_space<smem>>
    %493 = vector.broadcast %492 : f32 to vector<8x8xf32>
    %494 = arith.mulf %493, %483 : vector<8x8xf32>
    %495 = arith.addf %477, %494 : vector<8x8xf32>
    %c111 = arith.constant 111 : index
    %496 = memref.load %arg3[%c111] : memref<144xf32, #tpu.memory_space<smem>>
    %497 = vector.broadcast %496 : f32 to vector<8x8xf32>
    %498 = arith.mulf %497, %483 : vector<8x8xf32>
    %499 = arith.addf %481, %498 : vector<8x8xf32>
    %c0_140 = arith.constant 0 : index
    %c0_141 = arith.constant 0 : index
    %c4_142 = arith.constant 4 : index
    %c1_143 = arith.constant 1 : index
    %c0_144 = arith.constant 0 : index
    %500 = vector.load %arg2[%c0_140, %c0_141, %c4_142, %c1_143, %c0_144] : memref<1x1x16x9x9xf32, #tpu.memory_space<vmem>>, vector<1x1x1x8x8xf32>
    %501 = vector.shape_cast %500 : vector<1x1x1x8x8xf32> to vector<8x8xf32>
    %c112 = arith.constant 112 : index
    %502 = memref.load %arg3[%c112] : memref<144xf32, #tpu.memory_space<smem>>
    %503 = vector.broadcast %502 : f32 to vector<8x8xf32>
    %504 = arith.mulf %503, %501 : vector<8x8xf32>
    %505 = arith.addf %487, %504 : vector<8x8xf32>
    %c113 = arith.constant 113 : index
    %506 = memref.load %arg3[%c113] : memref<144xf32, #tpu.memory_space<smem>>
    %507 = vector.broadcast %506 : f32 to vector<8x8xf32>
    %508 = arith.mulf %507, %501 : vector<8x8xf32>
    %509 = arith.addf %491, %508 : vector<8x8xf32>
    %c114 = arith.constant 114 : index
    %510 = memref.load %arg3[%c114] : memref<144xf32, #tpu.memory_space<smem>>
    %511 = vector.broadcast %510 : f32 to vector<8x8xf32>
    %512 = arith.mulf %511, %501 : vector<8x8xf32>
    %513 = arith.addf %495, %512 : vector<8x8xf32>
    %c115 = arith.constant 115 : index
    %514 = memref.load %arg3[%c115] : memref<144xf32, #tpu.memory_space<smem>>
    %515 = vector.broadcast %514 : f32 to vector<8x8xf32>
    %516 = arith.mulf %515, %501 : vector<8x8xf32>
    %517 = arith.addf %499, %516 : vector<8x8xf32>
    %c0_145 = arith.constant 0 : index
    %c0_146 = arith.constant 0 : index
    %c5_147 = arith.constant 5 : index
    %c1_148 = arith.constant 1 : index
    %c0_149 = arith.constant 0 : index
    %518 = vector.load %arg2[%c0_145, %c0_146, %c5_147, %c1_148, %c0_149] : memref<1x1x16x9x9xf32, #tpu.memory_space<vmem>>, vector<1x1x1x8x8xf32>
    %519 = vector.shape_cast %518 : vector<1x1x1x8x8xf32> to vector<8x8xf32>
    %c116 = arith.constant 116 : index
    %520 = memref.load %arg3[%c116] : memref<144xf32, #tpu.memory_space<smem>>
    %521 = vector.broadcast %520 : f32 to vector<8x8xf32>
    %522 = arith.mulf %521, %519 : vector<8x8xf32>
    %523 = arith.addf %505, %522 : vector<8x8xf32>
    %c117 = arith.constant 117 : index
    %524 = memref.load %arg3[%c117] : memref<144xf32, #tpu.memory_space<smem>>
    %525 = vector.broadcast %524 : f32 to vector<8x8xf32>
    %526 = arith.mulf %525, %519 : vector<8x8xf32>
    %527 = arith.addf %509, %526 : vector<8x8xf32>
    %c118 = arith.constant 118 : index
    %528 = memref.load %arg3[%c118] : memref<144xf32, #tpu.memory_space<smem>>
    %529 = vector.broadcast %528 : f32 to vector<8x8xf32>
    %530 = arith.mulf %529, %519 : vector<8x8xf32>
    %531 = arith.addf %513, %530 : vector<8x8xf32>
    %c119 = arith.constant 119 : index
    %532 = memref.load %arg3[%c119] : memref<144xf32, #tpu.memory_space<smem>>
    %533 = vector.broadcast %532 : f32 to vector<8x8xf32>
    %534 = arith.mulf %533, %519 : vector<8x8xf32>
    %535 = arith.addf %517, %534 : vector<8x8xf32>
    %c0_150 = arith.constant 0 : index
    %c0_151 = arith.constant 0 : index
    %c6_152 = arith.constant 6 : index
    %c1_153 = arith.constant 1 : index
    %c0_154 = arith.constant 0 : index
    %536 = vector.load %arg2[%c0_150, %c0_151, %c6_152, %c1_153, %c0_154] : memref<1x1x16x9x9xf32, #tpu.memory_space<vmem>>, vector<1x1x1x8x8xf32>
    %537 = vector.shape_cast %536 : vector<1x1x1x8x8xf32> to vector<8x8xf32>
    %c120 = arith.constant 120 : index
    %538 = memref.load %arg3[%c120] : memref<144xf32, #tpu.memory_space<smem>>
    %539 = vector.broadcast %538 : f32 to vector<8x8xf32>
    %540 = arith.mulf %539, %537 : vector<8x8xf32>
    %541 = arith.addf %523, %540 : vector<8x8xf32>
    %c121 = arith.constant 121 : index
    %542 = memref.load %arg3[%c121] : memref<144xf32, #tpu.memory_space<smem>>
    %543 = vector.broadcast %542 : f32 to vector<8x8xf32>
    %544 = arith.mulf %543, %537 : vector<8x8xf32>
    %545 = arith.addf %527, %544 : vector<8x8xf32>
    %c122 = arith.constant 122 : index
    %546 = memref.load %arg3[%c122] : memref<144xf32, #tpu.memory_space<smem>>
    %547 = vector.broadcast %546 : f32 to vector<8x8xf32>
    %548 = arith.mulf %547, %537 : vector<8x8xf32>
    %549 = arith.addf %531, %548 : vector<8x8xf32>
    %c123 = arith.constant 123 : index
    %550 = memref.load %arg3[%c123] : memref<144xf32, #tpu.memory_space<smem>>
    %551 = vector.broadcast %550 : f32 to vector<8x8xf32>
    %552 = arith.mulf %551, %537 : vector<8x8xf32>
    %553 = arith.addf %535, %552 : vector<8x8xf32>
    %c0_155 = arith.constant 0 : index
    %c0_156 = arith.constant 0 : index
    %c7_157 = arith.constant 7 : index
    %c1_158 = arith.constant 1 : index
    %c0_159 = arith.constant 0 : index
    %554 = vector.load %arg2[%c0_155, %c0_156, %c7_157, %c1_158, %c0_159] : memref<1x1x16x9x9xf32, #tpu.memory_space<vmem>>, vector<1x1x1x8x8xf32>
    %555 = vector.shape_cast %554 : vector<1x1x1x8x8xf32> to vector<8x8xf32>
    %c124 = arith.constant 124 : index
    %556 = memref.load %arg3[%c124] : memref<144xf32, #tpu.memory_space<smem>>
    %557 = vector.broadcast %556 : f32 to vector<8x8xf32>
    %558 = arith.mulf %557, %555 : vector<8x8xf32>
    %559 = arith.addf %541, %558 : vector<8x8xf32>
    %c125 = arith.constant 125 : index
    %560 = memref.load %arg3[%c125] : memref<144xf32, #tpu.memory_space<smem>>
    %561 = vector.broadcast %560 : f32 to vector<8x8xf32>
    %562 = arith.mulf %561, %555 : vector<8x8xf32>
    %563 = arith.addf %545, %562 : vector<8x8xf32>
    %c126 = arith.constant 126 : index
    %564 = memref.load %arg3[%c126] : memref<144xf32, #tpu.memory_space<smem>>
    %565 = vector.broadcast %564 : f32 to vector<8x8xf32>
    %566 = arith.mulf %565, %555 : vector<8x8xf32>
    %567 = arith.addf %549, %566 : vector<8x8xf32>
    %c127 = arith.constant 127 : index
    %568 = memref.load %arg3[%c127] : memref<144xf32, #tpu.memory_space<smem>>
    %569 = vector.broadcast %568 : f32 to vector<8x8xf32>
    %570 = arith.mulf %569, %555 : vector<8x8xf32>
    %571 = arith.addf %553, %570 : vector<8x8xf32>
    %c0_160 = arith.constant 0 : index
    %c0_161 = arith.constant 0 : index
    %c0_162 = arith.constant 0 : index
    %c1_163 = arith.constant 1 : index
    %c1_164 = arith.constant 1 : index
    %572 = vector.load %arg2[%c0_160, %c0_161, %c0_162, %c1_163, %c1_164] : memref<1x1x16x9x9xf32, #tpu.memory_space<vmem>>, vector<1x1x1x8x8xf32>
    %573 = vector.shape_cast %572 : vector<1x1x1x8x8xf32> to vector<8x8xf32>
    %c128 = arith.constant 128 : index
    %574 = memref.load %arg3[%c128] : memref<144xf32, #tpu.memory_space<smem>>
    %575 = vector.broadcast %574 : f32 to vector<8x8xf32>
    %576 = arith.mulf %575, %573 : vector<8x8xf32>
    %577 = arith.addf %559, %576 : vector<8x8xf32>
    %c129 = arith.constant 129 : index
    %578 = memref.load %arg3[%c129] : memref<144xf32, #tpu.memory_space<smem>>
    %579 = vector.broadcast %578 : f32 to vector<8x8xf32>
    %580 = arith.mulf %579, %573 : vector<8x8xf32>
    %581 = arith.addf %563, %580 : vector<8x8xf32>
    %c130 = arith.constant 130 : index
    %582 = memref.load %arg3[%c130] : memref<144xf32, #tpu.memory_space<smem>>
    %583 = vector.broadcast %582 : f32 to vector<8x8xf32>
    %584 = arith.mulf %583, %573 : vector<8x8xf32>
    %585 = arith.addf %567, %584 : vector<8x8xf32>
    %c131 = arith.constant 131 : index
    %586 = memref.load %arg3[%c131] : memref<144xf32, #tpu.memory_space<smem>>
    %587 = vector.broadcast %586 : f32 to vector<8x8xf32>
    %588 = arith.mulf %587, %573 : vector<8x8xf32>
    %589 = arith.addf %571, %588 : vector<8x8xf32>
    %c0_165 = arith.constant 0 : index
    %c0_166 = arith.constant 0 : index
    %c1_167 = arith.constant 1 : index
    %c1_168 = arith.constant 1 : index
    %c1_169 = arith.constant 1 : index
    %590 = vector.load %arg2[%c0_165, %c0_166, %c1_167, %c1_168, %c1_169] : memref<1x1x16x9x9xf32, #tpu.memory_space<vmem>>, vector<1x1x1x8x8xf32>
    %591 = vector.shape_cast %590 : vector<1x1x1x8x8xf32> to vector<8x8xf32>
    %c132 = arith.constant 132 : index
    %592 = memref.load %arg3[%c132] : memref<144xf32, #tpu.memory_space<smem>>
    %593 = vector.broadcast %592 : f32 to vector<8x8xf32>
    %594 = arith.mulf %593, %591 : vector<8x8xf32>
    %595 = arith.addf %577, %594 : vector<8x8xf32>
    %c133 = arith.constant 133 : index
    %596 = memref.load %arg3[%c133] : memref<144xf32, #tpu.memory_space<smem>>
    %597 = vector.broadcast %596 : f32 to vector<8x8xf32>
    %598 = arith.mulf %597, %591 : vector<8x8xf32>
    %599 = arith.addf %581, %598 : vector<8x8xf32>
    %c134 = arith.constant 134 : index
    %600 = memref.load %arg3[%c134] : memref<144xf32, #tpu.memory_space<smem>>
    %601 = vector.broadcast %600 : f32 to vector<8x8xf32>
    %602 = arith.mulf %601, %591 : vector<8x8xf32>
    %603 = arith.addf %585, %602 : vector<8x8xf32>
    %c135 = arith.constant 135 : index
    %604 = memref.load %arg3[%c135] : memref<144xf32, #tpu.memory_space<smem>>
    %605 = vector.broadcast %604 : f32 to vector<8x8xf32>
    %606 = arith.mulf %605, %591 : vector<8x8xf32>
    %607 = arith.addf %589, %606 : vector<8x8xf32>
    %c0_170 = arith.constant 0 : index
    %c0_171 = arith.constant 0 : index
    %c2_172 = arith.constant 2 : index
    %c1_173 = arith.constant 1 : index
    %c1_174 = arith.constant 1 : index
    %608 = vector.load %arg2[%c0_170, %c0_171, %c2_172, %c1_173, %c1_174] : memref<1x1x16x9x9xf32, #tpu.memory_space<vmem>>, vector<1x1x1x8x8xf32>
    %609 = vector.shape_cast %608 : vector<1x1x1x8x8xf32> to vector<8x8xf32>
    %c136 = arith.constant 136 : index
    %610 = memref.load %arg3[%c136] : memref<144xf32, #tpu.memory_space<smem>>
    %611 = vector.broadcast %610 : f32 to vector<8x8xf32>
    %612 = arith.mulf %611, %609 : vector<8x8xf32>
    %613 = arith.addf %595, %612 : vector<8x8xf32>
    %c137 = arith.constant 137 : index
    %614 = memref.load %arg3[%c137] : memref<144xf32, #tpu.memory_space<smem>>
    %615 = vector.broadcast %614 : f32 to vector<8x8xf32>
    %616 = arith.mulf %615, %609 : vector<8x8xf32>
    %617 = arith.addf %599, %616 : vector<8x8xf32>
    %c138 = arith.constant 138 : index
    %618 = memref.load %arg3[%c138] : memref<144xf32, #tpu.memory_space<smem>>
    %619 = vector.broadcast %618 : f32 to vector<8x8xf32>
    %620 = arith.mulf %619, %609 : vector<8x8xf32>
    %621 = arith.addf %603, %620 : vector<8x8xf32>
    %c139 = arith.constant 139 : index
    %622 = memref.load %arg3[%c139] : memref<144xf32, #tpu.memory_space<smem>>
    %623 = vector.broadcast %622 : f32 to vector<8x8xf32>
    %624 = arith.mulf %623, %609 : vector<8x8xf32>
    %625 = arith.addf %607, %624 : vector<8x8xf32>
    %c0_175 = arith.constant 0 : index
    %c0_176 = arith.constant 0 : index
    %c3_177 = arith.constant 3 : index
    %c1_178 = arith.constant 1 : index
    %c1_179 = arith.constant 1 : index
    %626 = vector.load %arg2[%c0_175, %c0_176, %c3_177, %c1_178, %c1_179] : memref<1x1x16x9x9xf32, #tpu.memory_space<vmem>>, vector<1x1x1x8x8xf32>
    %627 = vector.shape_cast %626 : vector<1x1x1x8x8xf32> to vector<8x8xf32>
    %c140 = arith.constant 140 : index
    %628 = memref.load %arg3[%c140] : memref<144xf32, #tpu.memory_space<smem>>
    %629 = vector.broadcast %628 : f32 to vector<8x8xf32>
    %630 = arith.mulf %629, %627 : vector<8x8xf32>
    %631 = arith.addf %613, %630 : vector<8x8xf32>
    %c141 = arith.constant 141 : index
    %632 = memref.load %arg3[%c141] : memref<144xf32, #tpu.memory_space<smem>>
    %633 = vector.broadcast %632 : f32 to vector<8x8xf32>
    %634 = arith.mulf %633, %627 : vector<8x8xf32>
    %635 = arith.addf %617, %634 : vector<8x8xf32>
    %c142 = arith.constant 142 : index
    %636 = memref.load %arg3[%c142] : memref<144xf32, #tpu.memory_space<smem>>
    %637 = vector.broadcast %636 : f32 to vector<8x8xf32>
    %638 = arith.mulf %637, %627 : vector<8x8xf32>
    %639 = arith.addf %621, %638 : vector<8x8xf32>
    %c143 = arith.constant 143 : index
    %640 = memref.load %arg3[%c143] : memref<144xf32, #tpu.memory_space<smem>>
    %641 = vector.broadcast %640 : f32 to vector<8x8xf32>
    %642 = arith.mulf %641, %627 : vector<8x8xf32>
    %643 = arith.addf %625, %642 : vector<8x8xf32>
    %c0_180 = arith.constant 0 : index
    %644 = memref.load %arg5[%c0_180] : memref<8xf32, #tpu.memory_space<smem>>
    %645 = vector.broadcast %644 : f32 to vector<8x8xf32>
    %646 = arith.addf %631, %645 : vector<8x8xf32>
    %cst = arith.constant 0.000000e+00 : f32
    %647 = vector.broadcast %cst : f32 to vector<8x8xf32>
    %648 = arith.maximumf %646, %647 : vector<8x8xf32>
    %c0_181 = arith.constant 0 : index
    %c0_182 = arith.constant 0 : index
    %c0_183 = arith.constant 0 : index
    %c0_184 = arith.constant 0 : index
    %649 = vector.load %arg6[%c0_181, %c0_182, %c0_183, %c0_184] : memref<1x8x8x8xf32, #tpu.memory_space<vmem>>, vector<1x1x8x8xf32>
    %650 = vector.shape_cast %649 : vector<1x1x8x8xf32> to vector<8x8xf32>
    %651 = vector.shape_cast %648 : vector<8x8xf32> to vector<1x1x8x8xf32>
    tpu.vector_store %arg6[%c0_181, %c0_182, %c0_183, %c0_184], %651 {strides = array<i32>} : memref<1x8x8x8xf32, #tpu.memory_space<vmem>>, vector<1x1x8x8xf32>,
    %c1_185 = arith.constant 1 : index
    %652 = memref.load %arg5[%c1_185] : memref<8xf32, #tpu.memory_space<smem>>
    %653 = vector.broadcast %652 : f32 to vector<8x8xf32>
    %654 = arith.addf %635, %653 : vector<8x8xf32>
    %cst_186 = arith.constant 0.000000e+00 : f32
    %655 = vector.broadcast %cst_186 : f32 to vector<8x8xf32>
    %656 = arith.maximumf %654, %655 : vector<8x8xf32>
    %c0_187 = arith.constant 0 : index
    %c1_188 = arith.constant 1 : index
    %c0_189 = arith.constant 0 : index
    %c0_190 = arith.constant 0 : index
    %657 = vector.load %arg6[%c0_187, %c1_188, %c0_189, %c0_190] : memref<1x8x8x8xf32, #tpu.memory_space<vmem>>, vector<1x1x8x8xf32>
    %658 = vector.shape_cast %657 : vector<1x1x8x8xf32> to vector<8x8xf32>
    %659 = vector.shape_cast %656 : vector<8x8xf32> to vector<1x1x8x8xf32>
    tpu.vector_store %arg6[%c0_187, %c1_188, %c0_189, %c0_190], %659 {strides = array<i32>} : memref<1x8x8x8xf32, #tpu.memory_space<vmem>>, vector<1x1x8x8xf32>,
    %c2_191 = arith.constant 2 : index
    %660 = memref.load %arg5[%c2_191] : memref<8xf32, #tpu.memory_space<smem>>
    %661 = vector.broadcast %660 : f32 to vector<8x8xf32>
    %662 = arith.addf %639, %661 : vector<8x8xf32>
    %cst_192 = arith.constant 0.000000e+00 : f32
    %663 = vector.broadcast %cst_192 : f32 to vector<8x8xf32>
    %664 = arith.maximumf %662, %663 : vector<8x8xf32>
    %c0_193 = arith.constant 0 : index
    %c2_194 = arith.constant 2 : index
    %c0_195 = arith.constant 0 : index
    %c0_196 = arith.constant 0 : index
    %665 = vector.load %arg6[%c0_193, %c2_194, %c0_195, %c0_196] : memref<1x8x8x8xf32, #tpu.memory_space<vmem>>, vector<1x1x8x8xf32>
    %666 = vector.shape_cast %665 : vector<1x1x8x8xf32> to vector<8x8xf32>
    %667 = vector.shape_cast %664 : vector<8x8xf32> to vector<1x1x8x8xf32>
    tpu.vector_store %arg6[%c0_193, %c2_194, %c0_195, %c0_196], %667 {strides = array<i32>} : memref<1x8x8x8xf32, #tpu.memory_space<vmem>>, vector<1x1x8x8xf32>,
    %c3_197 = arith.constant 3 : index
    %668 = memref.load %arg5[%c3_197] : memref<8xf32, #tpu.memory_space<smem>>
    %669 = vector.broadcast %668 : f32 to vector<8x8xf32>
    %670 = arith.addf %643, %669 : vector<8x8xf32>
    %cst_198 = arith.constant 0.000000e+00 : f32
    %671 = vector.broadcast %cst_198 : f32 to vector<8x8xf32>
    %672 = arith.maximumf %670, %671 : vector<8x8xf32>
    %c0_199 = arith.constant 0 : index
    %c3_200 = arith.constant 3 : index
    %c0_201 = arith.constant 0 : index
    %c0_202 = arith.constant 0 : index
    %673 = vector.load %arg6[%c0_199, %c3_200, %c0_201, %c0_202] : memref<1x8x8x8xf32, #tpu.memory_space<vmem>>, vector<1x1x8x8xf32>
    %674 = vector.shape_cast %673 : vector<1x1x8x8xf32> to vector<8x8xf32>
    %675 = vector.shape_cast %672 : vector<8x8xf32> to vector<1x1x8x8xf32>
    tpu.vector_store %arg6[%c0_199, %c3_200, %c0_201, %c0_202], %675 {strides = array<i32>} : memref<1x8x8x8xf32, #tpu.memory_space<vmem>>, vector<1x1x8x8xf32>,
    %c0_203 = arith.constant 0 : index
    %c0_204 = arith.constant 0 : index
    %c12_205 = arith.constant 12 : index
    %c0_206 = arith.constant 0 : index
    %c0_207 = arith.constant 0 : index
    %676 = vector.load %arg2[%c0_203, %c0_204, %c12_205, %c0_206, %c0_207] : memref<1x1x16x9x9xf32, #tpu.memory_space<vmem>>, vector<1x1x1x8x8xf32>
    %677 = vector.shape_cast %676 : vector<1x1x1x8x8xf32> to vector<8x8xf32>
    %c0_208 = arith.constant 0 : index
    %c0_209 = arith.constant 0 : index
    %c8_210 = arith.constant 8 : index
    %c0_211 = arith.constant 0 : index
    %c1_212 = arith.constant 1 : index
    %678 = vector.load %arg2[%c0_208, %c0_209, %c8_210, %c0_211, %c1_212] : memref<1x1x16x9x9xf32, #tpu.memory_space<vmem>>, vector<1x1x1x8x8xf32>
    %679 = vector.shape_cast %678 : vector<1x1x1x8x8xf32> to vector<8x8xf32>
    %680 = arith.maximumf %677, %679 : vector<8x8xf32>
    %c0_213 = arith.constant 0 : index
    %c0_214 = arith.constant 0 : index
    %c4_215 = arith.constant 4 : index
    %c1_216 = arith.constant 1 : index
    %c0_217 = arith.constant 0 : index
    %681 = vector.load %arg2[%c0_213, %c0_214, %c4_215, %c1_216, %c0_217] : memref<1x1x16x9x9xf32, #tpu.memory_space<vmem>>, vector<1x1x1x8x8xf32>
    %682 = vector.shape_cast %681 : vector<1x1x1x8x8xf32> to vector<8x8xf32>
    %c0_218 = arith.constant 0 : index
    %c0_219 = arith.constant 0 : index
    %c0_220 = arith.constant 0 : index
    %c1_221 = arith.constant 1 : index
    %c1_222 = arith.constant 1 : index
    %683 = vector.load %arg2[%c0_218, %c0_219, %c0_220, %c1_221, %c1_222] : memref<1x1x16x9x9xf32, #tpu.memory_space<vmem>>, vector<1x1x1x8x8xf32>
    %684 = vector.shape_cast %683 : vector<1x1x1x8x8xf32> to vector<8x8xf32>
    %685 = arith.maximumf %682, %684 : vector<8x8xf32>
    %686 = arith.maximumf %680, %685 : vector<8x8xf32>
    %c4_223 = arith.constant 4 : index
    %687 = memref.load %arg4[%c4_223] : memref<8xf32, #tpu.memory_space<smem>>
    %688 = vector.broadcast %687 : f32 to vector<8x8xf32>
    %689 = arith.mulf %686, %688 : vector<8x8xf32>
    %c4_224 = arith.constant 4 : index
    %690 = memref.load %arg5[%c4_224] : memref<8xf32, #tpu.memory_space<smem>>
    %691 = vector.broadcast %690 : f32 to vector<8x8xf32>
    %692 = arith.addf %689, %691 : vector<8x8xf32>
    %cst_225 = arith.constant 0.000000e+00 : f32
    %693 = vector.broadcast %cst_225 : f32 to vector<8x8xf32>
    %694 = arith.maximumf %692, %693 : vector<8x8xf32>
    %c0_226 = arith.constant 0 : index
    %c4_227 = arith.constant 4 : index
    %c0_228 = arith.constant 0 : index
    %c0_229 = arith.constant 0 : index
    %695 = vector.load %arg6[%c0_226, %c4_227, %c0_228, %c0_229] : memref<1x8x8x8xf32, #tpu.memory_space<vmem>>, vector<1x1x8x8xf32>
    %696 = vector.shape_cast %695 : vector<1x1x8x8xf32> to vector<8x8xf32>
    %697 = vector.shape_cast %694 : vector<8x8xf32> to vector<1x1x8x8xf32>
    tpu.vector_store %arg6[%c0_226, %c4_227, %c0_228, %c0_229], %697 {strides = array<i32>} : memref<1x8x8x8xf32, #tpu.memory_space<vmem>>, vector<1x1x8x8xf32>,
    %c0_230 = arith.constant 0 : index
    %c0_231 = arith.constant 0 : index
    %c13_232 = arith.constant 13 : index
    %c0_233 = arith.constant 0 : index
    %c0_234 = arith.constant 0 : index
    %698 = vector.load %arg2[%c0_230, %c0_231, %c13_232, %c0_233, %c0_234] : memref<1x1x16x9x9xf32, #tpu.memory_space<vmem>>, vector<1x1x1x8x8xf32>
    %699 = vector.shape_cast %698 : vector<1x1x1x8x8xf32> to vector<8x8xf32>
    %c0_235 = arith.constant 0 : index
    %c0_236 = arith.constant 0 : index
    %c9_237 = arith.constant 9 : index
    %c0_238 = arith.constant 0 : index
    %c1_239 = arith.constant 1 : index
    %700 = vector.load %arg2[%c0_235, %c0_236, %c9_237, %c0_238, %c1_239] : memref<1x1x16x9x9xf32, #tpu.memory_space<vmem>>, vector<1x1x1x8x8xf32>
    %701 = vector.shape_cast %700 : vector<1x1x1x8x8xf32> to vector<8x8xf32>
    %702 = arith.maximumf %699, %701 : vector<8x8xf32>
    %c0_240 = arith.constant 0 : index
    %c0_241 = arith.constant 0 : index
    %c5_242 = arith.constant 5 : index
    %c1_243 = arith.constant 1 : index
    %c0_244 = arith.constant 0 : index
    %703 = vector.load %arg2[%c0_240, %c0_241, %c5_242, %c1_243, %c0_244] : memref<1x1x16x9x9xf32, #tpu.memory_space<vmem>>, vector<1x1x1x8x8xf32>
    %704 = vector.shape_cast %703 : vector<1x1x1x8x8xf32> to vector<8x8xf32>
    %c0_245 = arith.constant 0 : index
    %c0_246 = arith.constant 0 : index
    %c1_247 = arith.constant 1 : index
    %c1_248 = arith.constant 1 : index
    %c1_249 = arith.constant 1 : index
    %705 = vector.load %arg2[%c0_245, %c0_246, %c1_247, %c1_248, %c1_249] : memref<1x1x16x9x9xf32, #tpu.memory_space<vmem>>, vector<1x1x1x8x8xf32>
    %706 = vector.shape_cast %705 : vector<1x1x1x8x8xf32> to vector<8x8xf32>
    %707 = arith.maximumf %704, %706 : vector<8x8xf32>
    %708 = arith.maximumf %702, %707 : vector<8x8xf32>
    %c5_250 = arith.constant 5 : index
    %709 = memref.load %arg4[%c5_250] : memref<8xf32, #tpu.memory_space<smem>>
    %710 = vector.broadcast %709 : f32 to vector<8x8xf32>
    %711 = arith.mulf %708, %710 : vector<8x8xf32>
    %c5_251 = arith.constant 5 : index
    %712 = memref.load %arg5[%c5_251] : memref<8xf32, #tpu.memory_space<smem>>
    %713 = vector.broadcast %712 : f32 to vector<8x8xf32>
    %714 = arith.addf %711, %713 : vector<8x8xf32>
    %cst_252 = arith.constant 0.000000e+00 : f32
    %715 = vector.broadcast %cst_252 : f32 to vector<8x8xf32>
    %716 = arith.maximumf %714, %715 : vector<8x8xf32>
    %c0_253 = arith.constant 0 : index
    %c5_254 = arith.constant 5 : index
    %c0_255 = arith.constant 0 : index
    %c0_256 = arith.constant 0 : index
    %717 = vector.load %arg6[%c0_253, %c5_254, %c0_255, %c0_256] : memref<1x8x8x8xf32, #tpu.memory_space<vmem>>, vector<1x1x8x8xf32>
    %718 = vector.shape_cast %717 : vector<1x1x8x8xf32> to vector<8x8xf32>
    %719 = vector.shape_cast %716 : vector<8x8xf32> to vector<1x1x8x8xf32>
    tpu.vector_store %arg6[%c0_253, %c5_254, %c0_255, %c0_256], %719 {strides = array<i32>} : memref<1x8x8x8xf32, #tpu.memory_space<vmem>>, vector<1x1x8x8xf32>,
    %c0_257 = arith.constant 0 : index
    %c0_258 = arith.constant 0 : index
    %c14_259 = arith.constant 14 : index
    %c0_260 = arith.constant 0 : index
    %c0_261 = arith.constant 0 : index
    %720 = vector.load %arg2[%c0_257, %c0_258, %c14_259, %c0_260, %c0_261] : memref<1x1x16x9x9xf32, #tpu.memory_space<vmem>>, vector<1x1x1x8x8xf32>
    %721 = vector.shape_cast %720 : vector<1x1x1x8x8xf32> to vector<8x8xf32>
    %c0_262 = arith.constant 0 : index
    %c0_263 = arith.constant 0 : index
    %c10_264 = arith.constant 10 : index
    %c0_265 = arith.constant 0 : index
    %c1_266 = arith.constant 1 : index
    %722 = vector.load %arg2[%c0_262, %c0_263, %c10_264, %c0_265, %c1_266] : memref<1x1x16x9x9xf32, #tpu.memory_space<vmem>>, vector<1x1x1x8x8xf32>
    %723 = vector.shape_cast %722 : vector<1x1x1x8x8xf32> to vector<8x8xf32>
    %724 = arith.maximumf %721, %723 : vector<8x8xf32>
    %c0_267 = arith.constant 0 : index
    %c0_268 = arith.constant 0 : index
    %c6_269 = arith.constant 6 : index
    %c1_270 = arith.constant 1 : index
    %c0_271 = arith.constant 0 : index
    %725 = vector.load %arg2[%c0_267, %c0_268, %c6_269, %c1_270, %c0_271] : memref<1x1x16x9x9xf32, #tpu.memory_space<vmem>>, vector<1x1x1x8x8xf32>
    %726 = vector.shape_cast %725 : vector<1x1x1x8x8xf32> to vector<8x8xf32>
    %c0_272 = arith.constant 0 : index
    %c0_273 = arith.constant 0 : index
    %c2_274 = arith.constant 2 : index
    %c1_275 = arith.constant 1 : index
    %c1_276 = arith.constant 1 : index
    %727 = vector.load %arg2[%c0_272, %c0_273, %c2_274, %c1_275, %c1_276] : memref<1x1x16x9x9xf32, #tpu.memory_space<vmem>>, vector<1x1x1x8x8xf32>
    %728 = vector.shape_cast %727 : vector<1x1x1x8x8xf32> to vector<8x8xf32>
    %729 = arith.maximumf %726, %728 : vector<8x8xf32>
    %730 = arith.maximumf %724, %729 : vector<8x8xf32>
    %c6_277 = arith.constant 6 : index
    %731 = memref.load %arg4[%c6_277] : memref<8xf32, #tpu.memory_space<smem>>
    %732 = vector.broadcast %731 : f32 to vector<8x8xf32>
    %733 = arith.mulf %730, %732 : vector<8x8xf32>
    %c6_278 = arith.constant 6 : index
    %734 = memref.load %arg5[%c6_278] : memref<8xf32, #tpu.memory_space<smem>>
    %735 = vector.broadcast %734 : f32 to vector<8x8xf32>
    %736 = arith.addf %733, %735 : vector<8x8xf32>
    %cst_279 = arith.constant 0.000000e+00 : f32
    %737 = vector.broadcast %cst_279 : f32 to vector<8x8xf32>
    %738 = arith.maximumf %736, %737 : vector<8x8xf32>
    %c0_280 = arith.constant 0 : index
    %c6_281 = arith.constant 6 : index
    %c0_282 = arith.constant 0 : index
    %c0_283 = arith.constant 0 : index
    %739 = vector.load %arg6[%c0_280, %c6_281, %c0_282, %c0_283] : memref<1x8x8x8xf32, #tpu.memory_space<vmem>>, vector<1x1x8x8xf32>
    %740 = vector.shape_cast %739 : vector<1x1x8x8xf32> to vector<8x8xf32>
    %741 = vector.shape_cast %738 : vector<8x8xf32> to vector<1x1x8x8xf32>
    tpu.vector_store %arg6[%c0_280, %c6_281, %c0_282, %c0_283], %741 {strides = array<i32>} : memref<1x8x8x8xf32, #tpu.memory_space<vmem>>, vector<1x1x8x8xf32>,
    %c0_284 = arith.constant 0 : index
    %c0_285 = arith.constant 0 : index
    %c15_286 = arith.constant 15 : index
    %c0_287 = arith.constant 0 : index
    %c0_288 = arith.constant 0 : index
    %742 = vector.load %arg2[%c0_284, %c0_285, %c15_286, %c0_287, %c0_288] : memref<1x1x16x9x9xf32, #tpu.memory_space<vmem>>, vector<1x1x1x8x8xf32>
    %743 = vector.shape_cast %742 : vector<1x1x1x8x8xf32> to vector<8x8xf32>
    %c0_289 = arith.constant 0 : index
    %c0_290 = arith.constant 0 : index
    %c11_291 = arith.constant 11 : index
    %c0_292 = arith.constant 0 : index
    %c1_293 = arith.constant 1 : index
    %744 = vector.load %arg2[%c0_289, %c0_290, %c11_291, %c0_292, %c1_293] : memref<1x1x16x9x9xf32, #tpu.memory_space<vmem>>, vector<1x1x1x8x8xf32>
    %745 = vector.shape_cast %744 : vector<1x1x1x8x8xf32> to vector<8x8xf32>
    %746 = arith.maximumf %743, %745 : vector<8x8xf32>
    %c0_294 = arith.constant 0 : index
    %c0_295 = arith.constant 0 : index
    %c7_296 = arith.constant 7 : index
    %c1_297 = arith.constant 1 : index
    %c0_298 = arith.constant 0 : index
    %747 = vector.load %arg2[%c0_294, %c0_295, %c7_296, %c1_297, %c0_298] : memref<1x1x16x9x9xf32, #tpu.memory_space<vmem>>, vector<1x1x1x8x8xf32>
    %748 = vector.shape_cast %747 : vector<1x1x1x8x8xf32> to vector<8x8xf32>
    %c0_299 = arith.constant 0 : index
    %c0_300 = arith.constant 0 : index
    %c3_301 = arith.constant 3 : index
    %c1_302 = arith.constant 1 : index
    %c1_303 = arith.constant 1 : index
    %749 = vector.load %arg2[%c0_299, %c0_300, %c3_301, %c1_302, %c1_303] : memref<1x1x16x9x9xf32, #tpu.memory_space<vmem>>, vector<1x1x1x8x8xf32>
    %750 = vector.shape_cast %749 : vector<1x1x1x8x8xf32> to vector<8x8xf32>
    %751 = arith.maximumf %748, %750 : vector<8x8xf32>
    %752 = arith.maximumf %746, %751 : vector<8x8xf32>
    %c7_304 = arith.constant 7 : index
    %753 = memref.load %arg4[%c7_304] : memref<8xf32, #tpu.memory_space<smem>>
    %754 = vector.broadcast %753 : f32 to vector<8x8xf32>
    %755 = arith.mulf %752, %754 : vector<8x8xf32>
    %c7_305 = arith.constant 7 : index
    %756 = memref.load %arg5[%c7_305] : memref<8xf32, #tpu.memory_space<smem>>
    %757 = vector.broadcast %756 : f32 to vector<8x8xf32>
    %758 = arith.addf %755, %757 : vector<8x8xf32>
    %cst_306 = arith.constant 0.000000e+00 : f32
    %759 = vector.broadcast %cst_306 : f32 to vector<8x8xf32>
    %760 = arith.maximumf %758, %759 : vector<8x8xf32>
    %c0_307 = arith.constant 0 : index
    %c7_308 = arith.constant 7 : index
    %c0_309 = arith.constant 0 : index
    %c0_310 = arith.constant 0 : index
    %761 = vector.load %arg6[%c0_307, %c7_308, %c0_309, %c0_310] : memref<1x8x8x8xf32, #tpu.memory_space<vmem>>, vector<1x1x8x8xf32>
    %762 = vector.shape_cast %761 : vector<1x1x8x8xf32> to vector<8x8xf32>
    %763 = vector.shape_cast %760 : vector<8x8xf32> to vector<1x1x8x8xf32>
    tpu.vector_store %arg6[%c0_307, %c7_308, %c0_309, %c0_310], %763 {strides = array<i32>} : memref<1x8x8x8xf32, #tpu.memory_space<vmem>>, vector<1x1x8x8xf32>,
    return
  }
  func.func @transform_0(%arg0: i32, %arg1: i32) -> (i32, i32, i32, i32, i32) {
    %c0_i32 = arith.constant 0 : i32
    %c0_i32_0 = arith.constant 0 : i32
    %c0_i32_1 = arith.constant 0 : i32
    %c0_i32_2 = arith.constant 0 : i32
    return %arg0, %arg1, %c0_i32, %c0_i32_0, %c0_i32_1 : i32, i32, i32, i32, i32
  }
  func.func @transform_1(%arg0: i32, %arg1: i32) -> i32 {
    %c0_i32 = arith.constant 0 : i32
    %c0_i32_0 = arith.constant 0 : i32
    return %c0_i32 : i32
  }
  func.func @transform_2(%arg0: i32, %arg1: i32) -> i32 {
    %c0_i32 = arith.constant 0 : i32
    %c0_i32_0 = arith.constant 0 : i32
    return %c0_i32 : i32
  }
  func.func @transform_3(%arg0: i32, %arg1: i32) -> i32 {
    %c0_i32 = arith.constant 0 : i32
    %c0_i32_0 = arith.constant 0 : i32
    return %c0_i32 : i32
  }
  func.func @transform_4(%arg0: i32, %arg1: i32) -> (i32, i32, i32, i32) {
    %c0_i32 = arith.constant 0 : i32
    %c0_i32_0 = arith.constant 0 : i32
    %c0_i32_1 = arith.constant 0 : i32
    return %arg0, %c0_i32, %arg1, %c0_i32_0 : i32, i32, i32, i32
  }
}

</mosaic_0001>

<llo_original>
// kernel: downsampler_block.1
$region0: #{downsampler_block.1}
  #allocation0 [shape = 'u32[]', space=smem, size = 0x4, offset = 0x4, fixed_abs, tag = 'smem constant byte address 0x4 - core index']
  #allocation1 [shape = 'u32[72,128]{1,0:T(1,128)}', space=vmem, size = 0x9000, scoped, tag = 'internal scratch']
  %s0 = inlined_call_operand.vmem [shape: f32[2,1,16,9,9], index: 0, kind: input, shape index: {}]
  %s1 = inlined_call_operand.vmem [shape: f32[144], index: 1, kind: input, shape index: {}]
  %s2 = inlined_call_operand.vmem [shape: f32[8], index: 2, kind: input, shape index: {}]
  %s3 = inlined_call_operand.vmem [shape: f32[8], index: 3, kind: input, shape index: {}]
  %s4 = inlined_call_operand.hbm [shape: f32[2,8,8,8], index: 4, kind: output, shape index: {}]
  %s5 = sld [smem:[#allocation0]]
  $region61: #{downsampler_block.1} parent=0
    _
  %s7 = ssub.s32 1, %s5
  %s8 = scalar_select 0, %s7, %s5
  $region1: #{downsampler_block.1} parent=0
    #allocation2 [shape = 'u8[1024]{0}', space=smem, size = 0x400, scoped, tag = 'input window, operand 1, single buffered']
    #allocation3 [shape = 's32[2]{0}', space=sflag, size = 0x8, scoped, tag = 'scoped memory for downsampler_block.1']
    #allocation4 [shape = 's32[2]{0}', space=sflag, size = 0x8, scoped, tag = 'scoped memory for downsampler_block.1']
    #allocation5 [shape = 'u8[512]{0}', space=smem, size = 0x200, scoped, tag = 'input window, operand 2, single buffered']
    #allocation6 [shape = 's32[1]{0}', space=sflag, size = 0x4, scoped, tag = 'scoped memory for downsampler_block.1']
    #allocation7 [shape = 'u8[512]{0}', space=smem, size = 0x200, scoped, tag = 'input window, operand 3, single buffered']
    #allocation8 [shape = 'u8[65536]{0}', space=vmem, size = 0x10000, scoped, tag = 'output window, operand 0']
    %9 = vsyncpa [#allocation4], 0
    %10 = vsyncpa [#allocation6], 0
    %11 = vsyncpa [#allocation3], 0
    %s12 = scalar_lea.sflag [#allocation3], 1
    %13 = vsyncpa %s12, 0
    loop: start=0, step=1, limit=4
    $region2: #{downsampler_block.1} parent=1 // loop_pre_header
      _
    $region3: #{downsampler_block.1} parent=1 // loop_header
      %s15 = sphi 0, %s19
      %p16 = scmp.ge.s32.totalorder %s15, 4
      %s22 = sphi 0, %s34
      %s23 = sphi 0, %s30
      %s24 = sphi 0, %s22
      %s25 = sphi 0, %s23
      %s26 = sphi 0, %s24
      %s27 = sphi 0, %s25
      %s39 = sphi 0, %s41
      %s42 = sphi 0, %s39
      %s43 = sphi 0, %s42
      %s59 = sphi 0, %s43
      %s63 = sphi 0, %s63
      %s65 = sphi 0, %s63
      %s66 = sphi 0, %s65
      %s80 = sphi 0, %s66
      %s84 = sphi 0, %s84
      %s86 = sphi 0, %s84
      %s87 = sphi 0, %s86
      %s101 = sphi 0, %s87
      %s105 = sphi 0, %s105
      %s107 = sphi 0, %s105
      %s108 = sphi 0, %s107
      %s122 = sphi 0, %s108
      %s130 = sphi 0, %s132
      %s133 = sphi 0, %s130
      %s134 = sphi 0, %s133
      %s150 = sphi 0, %s134
    $region4: #{downsampler_block.1} parent=1 // loop_header_branch
      %18 = sbr.rel (%p16) target = $region8
    $region5: #{downsampler_block.1} parent=1 // loop_body
      %s20 = ssub.s32 %s15, 1
      %s21 = ssub.s32 %s15, 2
      %s28 = sadd.s32 1, %s23
      %p29 = scmp.ge.s32.totalorder %s28, 1
      %s30 = scalar_select %p29, 0, %s28
      %s31 = sadd.s32 1, %s22
      %s32 = scalar_select %p29, %s31, %s22
      %p33 = scmp.ge.s32.totalorder %s32, 2
      %s34 = scalar_select %p33, 0, %s32
      %s35 = ssub.s32 %s22, %s34
      %s36 = ssub.s32 %s23, %s30
      %s37 = sor.u32 %s35, %s36
      %p38 = scmp.eq.s32.totalorder %s37, 0
      %s40 = sadd.s32 %s39, 1
      %s41 = scalar_select %p38, %s39, %s40
      %p44 = pneg %p38
      %p45 = scmp.eq.s32.totalorder %s15, 1
      %p46 = por %p44, %p45
      %p47 = scmp.ne.s32.totalorder %s39, %s42
      %p48 = scmp.eq.s32.totalorder %s15, 0
      %p49 = por %p47, %p48
      %p50 = scmp.ne.s32.totalorder %s39, %s42
      %p51 = scmp.eq.s32.totalorder %s20, 1
      %p52 = por %p50, %p51
      %p53 = scmp.ne.s32.totalorder %s42, %s43
      %p54 = scmp.eq.s32.totalorder %s20, 0
      %p55 = por %p53, %p54
      %p56 = scmp.ne.s32.totalorder %s42, %s43
      %p57 = scmp.eq.s32.totalorder %s21, 1
      %p58 = por %p56, %p57
      %p60 = scmp.ne.s32.totalorder %s43, %s59
      %p61 = scmp.eq.s32.totalorder %s21, 0
      %p62 = por %p60, %p61
      %s64 = sadd.s32 %s63, 1
      %p67 = scmp.eq.s32.totalorder %s15, 1
      %p68 = scmp.ne.s32.totalorder %s63, %s65
      %p69 = scmp.eq.s32.totalorder %s15, 0
      %p70 = por %p68, %p69
      %p71 = scmp.ne.s32.totalorder %s63, %s65
      %p72 = scmp.eq.s32.totalorder %s20, 1
      %p73 = por %p71, %p72
      %p74 = scmp.ne.s32.totalorder %s65, %s66
      %p75 = scmp.eq.s32.totalorder %s20, 0
      %p76 = por %p74, %p75
      %p77 = scmp.ne.s32.totalorder %s65, %s66
      %p78 = scmp.eq.s32.totalorder %s21, 1
      %p79 = por %p77, %p78
      %p81 = scmp.ne.s32.totalorder %s66, %s80
      %p82 = scmp.eq.s32.totalorder %s21, 0
      %p83 = por %p81, %p82
      %s85 = sadd.s32 %s84, 1
      %p88 = scmp.eq.s32.totalorder %s15, 1
      %p89 = scmp.ne.s32.totalorder %s84, %s86
      %p90 = scmp.eq.s32.totalorder %s15, 0
      %p91 = por %p89, %p90
      %p92 = scmp.ne.s32.totalorder %s84, %s86
      %p93 = scmp.eq.s32.totalorder %s20, 1
      %p94 = por %p92, %p93
      %p95 = scmp.ne.s32.totalorder %s86, %s87
      %p96 = scmp.eq.s32.totalorder %s20, 0
      %p97 = por %p95, %p96
      %p98 = scmp.ne.s32.totalorder %s86, %s87
      %p99 = scmp.eq.s32.totalorder %s21, 1
      %p100 = por %p98, %p99
      %p102 = scmp.ne.s32.totalorder %s87, %s101
      %p103 = scmp.eq.s32.totalorder %s21, 0
      %p104 = por %p102, %p103
      %s106 = sadd.s32 %s105, 1
      %p109 = scmp.eq.s32.totalorder %s15, 1
      %p110 = scmp.ne.s32.totalorder %s105, %s107
      %p111 = scmp.eq.s32.totalorder %s15, 0
      %p112 = por %p110, %p111
      %p113 = scmp.ne.s32.totalorder %s105, %s107
      %p114 = scmp.eq.s32.totalorder %s20, 1
      %p115 = por %p113, %p114
      %p116 = scmp.ne.s32.totalorder %s107, %s108
      %p117 = scmp.eq.s32.totalorder %s20, 0
      %p118 = por %p116, %p117
      %p119 = scmp.ne.s32.totalorder %s107, %s108
      %p120 = scmp.eq.s32.totalorder %s21, 1
      %p121 = por %p119, %p120
      %p123 = scmp.ne.s32.totalorder %s108, %s122
      %p124 = scmp.eq.s32.totalorder %s21, 0
      %p125 = por %p123, %p124
      %s126 = ssub.s32 %s22, %s34
      %s127 = ssub.s32 %s23, %s30
      %s128 = sor.u32 %s126, %s127
      %p129 = scmp.eq.s32.totalorder %s128, 0
      %s131 = sadd.s32 %s130, 1
      %s132 = scalar_select %p129, %s130, %s131
      %p135 = pneg %p129
      %p136 = scmp.eq.s32.totalorder %s15, 1
      %p137 = por %p135, %p136
      %p138 = scmp.ne.s32.totalorder %s130, %s133
      %p139 = scmp.eq.s32.totalorder %s15, 0
      %p140 = por %p138, %p139
      %p141 = scmp.ne.s32.totalorder %s130, %s133
      %p142 = scmp.eq.s32.totalorder %s20, 1
      %p143 = por %p141, %p142
      %p144 = scmp.ne.s32.totalorder %s133, %s134
      %p145 = scmp.eq.s32.totalorder %s20, 0
      %p146 = por %p144, %p145
      %p147 = scmp.ne.s32.totalorder %s133, %s134
      %p148 = scmp.eq.s32.totalorder %s21, 1
      %p149 = por %p147, %p148
      %p151 = scmp.ne.s32.totalorder %s134, %s150
      %p152 = scmp.eq.s32.totalorder %s21, 0
      %p153 = por %p151, %p152
      %p154 = scmp.le.s32.totalorder 1, %s15
      %p155 = scmp.lt.s32.totalorder %s15, 3
      %p156 = pnand %p154, %p155
      %p157 = pneg %p156
      // Predicated region
      $region9: #{downsampler_block.1} parent=5 // pred_check
        _
      $region10: #{downsampler_block.1} parent=5 // pred_check_branch
        %159 = sbr.rel (%p156) target = $region12
      $region11: #{downsampler_block.1} parent=5 // pred_region
        %s160 = ssub.s32 %s15, 1
        // Predicated region
        $region13: #{downsampler_block.1} parent=11 // pred_check
          %p161 = pneg %p76
        $region14: #{downsampler_block.1} parent=11 // pred_check_branch
          %163 = sbr.rel (%p161) target = $region16
        $region15: #{downsampler_block.1} parent=11 // pred_region
          %165 = vsyncadd [#allocation4], 0
          %s167 = sshll.u32 %s1, 4
          %s168 = int_to_ptr.vmem [resolvable:$true] %s167
          %170 = dma.vmem_to_smem %s168, 32, [#allocation2], [#allocation4]
        $region16: #{downsampler_block.1} parent=11 // pred_fallthru
          _
        // Predicated region
        $region17: #{downsampler_block.1} parent=11 // pred_check
          %p171 = pneg %p97
        $region18: #{downsampler_block.1} parent=11 // pred_check_branch
          %173 = sbr.rel (%p171) target = $region20
        $region19: #{downsampler_block.1} parent=11 // pred_region
          %175 = vsyncadd [#allocation6], 0
          %s177 = sshll.u32 %s2, 4
          %s178 = int_to_ptr.vmem [resolvable:$true] %s177
          %180 = dma.vmem_to_smem %s178, 16, [#allocation5], [#allocation6]
        $region20: #{downsampler_block.1} parent=11 // pred_fallthru
          _
        // Predicated region
        $region21: #{downsampler_block.1} parent=11 // pred_check
          %p181 = pneg %p118
        $region22: #{downsampler_block.1} parent=11 // pred_check_branch
          %183 = sbr.rel (%p181) target = $region24
        $region23: #{downsampler_block.1} parent=11 // pred_region
          %185 = vsyncadd [#allocation6], 0
          %s187 = sshll.u32 %s3, 4
          %s188 = int_to_ptr.vmem [resolvable:$true] %s187
          %190 = dma.vmem_to_smem %s188, 16, [#allocation7], [#allocation6]
        $region24: #{downsampler_block.1} parent=11 // pred_fallthru
          _
      $region12: #{downsampler_block.1} parent=5 // pred_fallthru
        _
      %p191 = scmp.lt.s32.totalorder %s15, 2
      // Predicated region
      $region25: #{downsampler_block.1} parent=5 // pred_check
        %p192 = pneg %p191
      $region26: #{downsampler_block.1} parent=5 // pred_check_branch
        %194 = sbr.rel (%p192) target = $region28
      $region27: #{downsampler_block.1} parent=5 // pred_region
        // Predicated region
        $region29: #{downsampler_block.1} parent=27 // pred_check
          %p195 = pneg %p49
        $region30: #{downsampler_block.1} parent=27 // pred_check_branch
          %197 = sbr.rel (%p195) target = $region32
        $region31: #{downsampler_block.1} parent=27 // pred_region
          %p198 = scmp.lt.s32.totalorder %s22, 1
          %s199 = scalar_select %p198, %s22, 1
          %p200 = scmp.lt.s32.totalorder %s23, 0
          %s201 = scalar_select %p200, %s23, 0
          %s202 = smul.addr %s201, 32
          %s203 = smul.addr %s199, 32
          %s204 = sadd.s32 %s202, %s203
          %s205 = smul.addr %s204, 8
          %s206 = scalar_lea.vmem %s0, %s205
        $region32: #{downsampler_block.1} parent=27 // pred_fallthru
          _
      $region28: #{downsampler_block.1} parent=5 // pred_fallthru
        _
      %p207 = scmp.le.s32.totalorder 1, %s15
      %p208 = scmp.lt.s32.totalorder %s15, 3
      %p209 = pnand %p207, %p208
      %p210 = pneg %p209
      // Predicated region
      $region33: #{downsampler_block.1} parent=5 // pred_check
        _
      $region34: #{downsampler_block.1} parent=5 // pred_check_branch
        %212 = sbr.rel (%p209) target = $region36
      $region35: #{downsampler_block.1} parent=5 // pred_region
        %s213 = ssub.s32 %s15, 1
        // Predicated region
        $region37: #{downsampler_block.1} parent=35 // pred_check
          %p214 = pneg %p76
        $region38: #{downsampler_block.1} parent=35 // pred_check_branch
          %216 = sbr.rel (%p214) target = $region40
        $region39: #{downsampler_block.1} parent=35 // pred_region
          %218 = dma.done [#allocation4], 32
        $region40: #{downsampler_block.1} parent=35 // pred_fallthru
          _
        // Predicated region
        $region41: #{downsampler_block.1} parent=35 // pred_check
          %p219 = pneg %p97
        $region42: #{downsampler_block.1} parent=35 // pred_check_branch
          %221 = sbr.rel (%p219) target = $region44
        $region43: #{downsampler_block.1} parent=35 // pred_region
          %223 = dma.done [#allocation6], 16
        $region44: #{downsampler_block.1} parent=35 // pred_fallthru
          _
        // Predicated region
        $region45: #{downsampler_block.1} parent=35 // pred_check
          %p224 = pneg %p118
        $region46: #{downsampler_block.1} parent=35 // pred_check_branch
          %226 = sbr.rel (%p224) target = $region48
        $region47: #{downsampler_block.1} parent=35 // pred_region
          %228 = dma.done [#allocation6], 16
        $region48: #{downsampler_block.1} parent=35 // pred_fallthru
          _
        %229 = sfence
        %p230 = scmp.lt.s32.totalorder %s24, 1
        %s231 = scalar_select %p230, %s24, 1
        %p232 = scmp.lt.s32.totalorder %s25, 0
        %s233 = scalar_select %p232, %s25, 0
        %s234 = smul.addr %s233, 32
        %s235 = smul.addr %s231, 32
        %s236 = sadd.s32 %s234, %s235
        %s237 = smul.addr %s236, 8
        %s238 = scalar_lea.vmem %s0, %s237
        %p239 = pneg %p55
        %p240 = pneg %p52
        %p241 = pneg %p76
        %p242 = pneg %p73
        %p243 = pneg %p97
        %p244 = pneg %p94
        %p245 = pneg %p118
        %p246 = pneg %p115
        %p247 = pneg %p146
        %p248 = pneg %p143
        %s249 = sand.u32 %s133, 1
        %s250 = scalar_lea.sflag [#allocation3], %s249
        %s251 = sand.u32 %s133, 1
        %s252 = smul.addr %s251, 64
        %s253 = scalar_lea.vmem [#allocation8], %s252
        %p254 = scmp.lt.s32.totalorder %s24, 1
        %s255 = scalar_select %p254, %s24, 1
        %p256 = scmp.lt.s32.totalorder %s25, 0
        %s257 = scalar_select %p256, %s25, 0
        %s258 = smul.addr %s257, 32
        %s259 = smul.addr %s255, 32
        %s260 = sadd.s32 %s258, %s259
        %s261 = smul.addr %s260, 8
        %s262 = scalar_lea.vmem %s0, %s261
        %v263 = vld [vmem:[%s262] sm:$0xff]
        %s264 = sld [smem:[#allocation2]]
        %v265 = vstv %s264
        %v266 = vmul.f32 %v265, %v263
        %s267 = sld [smem:[#allocation2 + $0x1]]
        %v268 = vstv %s267
        %v269 = vmul.f32 %v268, %v263
        %s270 = sld [smem:[#allocation2 + $0x2]]
        %v271 = vstv %s270
        %v272 = vmul.f32 %v271, %v263
        %s273 = sld [smem:[#allocation2 + $0x3]]
        %v274 = vstv %s273
        %v275 = vmul.f32 %v274, %v263
        %s276 = scalar_lea.vmem %s262, 16
        %v277 = vld [vmem:[%s276] sm:$0xff]
        %s278 = sld [smem:[#allocation2 + $0x4]]
        %v279 = vstv %s278
        %v280 = vmul.f32 %v279, %v277
        %v281 = vadd.f32 %v266, %v280
        %s282 = sld [smem:[#allocation2 + $0x5]]
        %v283 = vstv %s282
        %v284 = vmul.f32 %v283, %v277
        %v285 = vadd.f32 %v269, %v284
        %s286 = sld [smem:[#allocation2 + $0x6]]
        %v287 = vstv %s286
        %v288 = vmul.f32 %v287, %v277
        %v289 = vadd.f32 %v272, %v288
        %s290 = sld [smem:[#allocation2 + $0x7]]
        %v291 = vstv %s290
        %v292 = vmul.f32 %v291, %v277
        %v293 = vadd.f32 %v275, %v292
        %s294 = scalar_lea.vmem %s262, 32
        %v295 = vld [vmem:[%s294] sm:$0xff]
        %s296 = sld [smem:[#allocation2 + $0x8]]
        %v297 = vstv %s296
        %v298 = vmul.f32 %v297, %v295
        %v299 = vadd.f32 %v281, %v298
        %s300 = sld [smem:[#allocation2 + $0x9]]
        %v301 = vstv %s300
        %v302 = vmul.f32 %v301, %v295
        %v303 = vadd.f32 %v285, %v302
        %s304 = sld [smem:[#allocation2 + $0xa]]
        %v305 = vstv %s304
        %v306 = vmul.f32 %v305, %v295
        %v307 = vadd.f32 %v289, %v306
        %s308 = sld [smem:[#allocation2 + $0xb]]
        %v309 = vstv %s308
        %v310 = vmul.f32 %v309, %v295
        %v311 = vadd.f32 %v293, %v310
        %s312 = scalar_lea.vmem %s262, 48
        %v313 = vld [vmem:[%s312] sm:$0xff]
        %s314 = sld [smem:[#allocation2 + $0xc]]
        %v315 = vstv %s314
        %v316 = vmul.f32 %v315, %v313
        %v317 = vadd.f32 %v299, %v316
        %s318 = sld [smem:[#allocation2 + $0xd]]
        %v319 = vstv %s318
        %v320 = vmul.f32 %v319, %v313
        %v321 = vadd.f32 %v303, %v320
        %s322 = sld [smem:[#allocation2 + $0xe]]
        %v323 = vstv %s322
        %v324 = vmul.f32 %v323, %v313
        %v325 = vadd.f32 %v307, %v324
        %s326 = sld [smem:[#allocation2 + $0xf]]
        %v327 = vstv %s326
        %v328 = vmul.f32 %v327, %v313
        %v329 = vadd.f32 %v311, %v328
        %s330 = scalar_lea.vmem %s262, 64
        %v331 = vld [vmem:[%s330] sm:$0xff]
        %s332 = sld [smem:[#allocation2 + $0x10]]
        %v333 = vstv %s332
        %v334 = vmul.f32 %v333, %v331
        %v335 = vadd.f32 %v317, %v334
        %s336 = sld [smem:[#allocation2 + $0x11]]
        %v337 = vstv %s336
        %v338 = vmul.f32 %v337, %v331
        %v339 = vadd.f32 %v321, %v338
        %s340 = sld [smem:[#allocation2 + $0x12]]
        %v341 = vstv %s340
        %v342 = vmul.f32 %v341, %v331
        %v343 = vadd.f32 %v325, %v342
        %s344 = sld [smem:[#allocation2 + $0x13]]
        %v345 = vstv %s344
        %v346 = vmul.f32 %v345, %v331
        %v347 = vadd.f32 %v329, %v346
        %s348 = scalar_lea.vmem %s262, 80
        %v349 = vld [vmem:[%s348] sm:$0xff]
        %s350 = sld [smem:[#allocation2 + $0x14]]
        %v351 = vstv %s350
        %v352 = vmul.f32 %v351, %v349
        %v353 = vadd.f32 %v335, %v352
        %s354 = sld [smem:[#allocation2 + $0x15]]
        %v355 = vstv %s354
        %v356 = vmul.f32 %v355, %v349
        %v357 = vadd.f32 %v339, %v356
        %s358 = sld [smem:[#allocation2 + $0x16]]
        %v359 = vstv %s358
        %v360 = vmul.f32 %v359, %v349
        %v361 = vadd.f32 %v343, %v360
        %s362 = sld [smem:[#allocation2 + $0x17]]
        %v363 = vstv %s362
        %v364 = vmul.f32 %v363, %v349
        %v365 = vadd.f32 %v347, %v364
        %s366 = scalar_lea.vmem %s262, 96
        %v367 = vld [vmem:[%s366] sm:$0xff]
        %s368 = sld [smem:[#allocation2 + $0x18]]
        %v369 = vstv %s368
        %v370 = vmul.f32 %v369, %v367
        %v371 = vadd.f32 %v353, %v370
        %s372 = sld [smem:[#allocation2 + $0x19]]
        %v373 = vstv %s372
        %v374 = vmul.f32 %v373, %v367
        %v375 = vadd.f32 %v357, %v374
        %s376 = sld [smem:[#allocation2 + $0x1a]]
        %v377 = vstv %s376
        %v378 = vmul.f32 %v377, %v367
        %v379 = vadd.f32 %v361, %v378
        %s380 = sld [smem:[#allocation2 + $0x1b]]
        %v381 = vstv %s380
        %v382 = vmul.f32 %v381, %v367
        %v383 = vadd.f32 %v365, %v382
        %s384 = scalar_lea.vmem %s262, 112
        %v385 = vld [vmem:[%s384] sm:$0xff]
        %s386 = sld [smem:[#allocation2 + $0x1c]]
        %v387 = vstv %s386
        %v388 = vmul.f32 %v387, %v385
        %v389 = vadd.f32 %v371, %v388
        %s390 = sld [smem:[#allocation2 + $0x1d]]
        %v391 = vstv %s390
        %v392 = vmul.f32 %v391, %v385
        %v393 = vadd.f32 %v375, %v392
        %s394 = sld [smem:[#allocation2 + $0x1e]]
        %v395 = vstv %s394
        %v396 = vmul.f32 %v395, %v385
        %v397 = vadd.f32 %v379, %v396
        %s398 = sld [smem:[#allocation2 + $0x1f]]
        %v399 = vstv %s398
        %v400 = vmul.f32 %v399, %v385
        %v401 = vadd.f32 %v383, %v400
        %s402 = sld [smem:[#allocation2 + $0x20]]
        %v403 = vstv %s402
        %v404 = vmul.f32 %v403, %v263
        %406 = vrot.lane.b32.xlu0 %v404, 127
        %v407 = vpop.permute.xlu0 %406
        %v409 = vadd.f32 %v389, %v407
        %s410 = sld [smem:[#allocation2 + $0x21]]
        %v411 = vstv %s410
        %v412 = vmul.f32 %v411, %v263
        %414 = vrot.lane.b32.xlu0 %v412, 127
        %v415 = vpop.permute.xlu0 %414
        %v417 = vadd.f32 %v393, %v415
        %s418 = sld [smem:[#allocation2 + $0x22]]
        %v419 = vstv %s418
        %v420 = vmul.f32 %v419, %v263
        %422 = vrot.lane.b32.xlu0 %v420, 127
        %v423 = vpop.permute.xlu0 %422
        %v425 = vadd.f32 %v397, %v423
        %s426 = sld [smem:[#allocation2 + $0x23]]
        %v427 = vstv %s426
        %v428 = vmul.f32 %v427, %v263
        %430 = vrot.lane.b32.xlu0 %v428, 127
        %v431 = vpop.permute.xlu0 %430
        %v433 = vadd.f32 %v401, %v431
        %s434 = sld [smem:[#allocation2 + $0x24]]
        %v435 = vstv %s434
        %v436 = vmul.f32 %v435, %v277
        %438 = vrot.lane.b32.xlu0 %v436, 127
        %v439 = vpop.permute.xlu0 %438
        %v441 = vadd.f32 %v409, %v439
        %s442 = sld [smem:[#allocation2 + $0x25]]
        %v443 = vstv %s442
        %v444 = vmul.f32 %v443, %v277
        %446 = vrot.lane.b32.xlu0 %v444, 127
        %v447 = vpop.permute.xlu0 %446
        %v449 = vadd.f32 %v417, %v447
        %s450 = sld [smem:[#allocation2 + $0x26]]
        %v451 = vstv %s450
        %v452 = vmul.f32 %v451, %v277
        %454 = vrot.lane.b32.xlu0 %v452, 127
        %v455 = vpop.permute.xlu0 %454
        %v457 = vadd.f32 %v425, %v455
        %s458 = sld [smem:[#allocation2 + $0x27]]
        %v459 = vstv %s458
        %v460 = vmul.f32 %v459, %v277
        %462 = vrot.lane.b32.xlu0 %v460, 127
        %v463 = vpop.permute.xlu0 %462
        %v465 = vadd.f32 %v433, %v463
        %s466 = sld [smem:[#allocation2 + $0x28]]
        %v467 = vstv %s466
        %v468 = vmul.f32 %v467, %v295
        %470 = vrot.lane.b32.xlu0 %v468, 127
        %v471 = vpop.permute.xlu0 %470
        %v473 = vadd.f32 %v441, %v471
        %s474 = sld [smem:[#allocation2 + $0x29]]
        %v475 = vstv %s474
        %v476 = vmul.f32 %v475, %v295
        %478 = vrot.lane.b32.xlu0 %v476, 127
        %v479 = vpop.permute.xlu0 %478
        %v481 = vadd.f32 %v449, %v479
        %s482 = sld [smem:[#allocation2 + $0x2a]]
        %v483 = vstv %s482
        %v484 = vmul.f32 %v483, %v295
        %486 = vrot.lane.b32.xlu0 %v484, 127
        %v487 = vpop.permute.xlu0 %486
        %v489 = vadd.f32 %v457, %v487
        %s490 = sld [smem:[#allocation2 + $0x2b]]
        %v491 = vstv %s490
        %v492 = vmul.f32 %v491, %v295
        %494 = vrot.lane.b32.xlu0 %v492, 127
        %v495 = vpop.permute.xlu0 %494
        %v497 = vadd.f32 %v465, %v495
        %s498 = sld [smem:[#allocation2 + $0x2c]]
        %v499 = vstv %s498
        %v500 = vmul.f32 %v499, %v313
        %502 = vrot.lane.b32.xlu0 %v500, 127
        %v503 = vpop.permute.xlu0 %502
        %v505 = vadd.f32 %v473, %v503
        %s506 = sld [smem:[#allocation2 + $0x2d]]
        %v507 = vstv %s506
        %v508 = vmul.f32 %v507, %v313
        %510 = vrot.lane.b32.xlu0 %v508, 127
        %v511 = vpop.permute.xlu0 %510
        %v513 = vadd.f32 %v481, %v511
        %s514 = sld [smem:[#allocation2 + $0x2e]]
        %v515 = vstv %s514
        %v516 = vmul.f32 %v515, %v313
        %518 = vrot.lane.b32.xlu0 %v516, 127
        %v519 = vpop.permute.xlu0 %518
        %v521 = vadd.f32 %v489, %v519
        %s522 = sld [smem:[#allocation2 + $0x2f]]
        %v523 = vstv %s522
        %v524 = vmul.f32 %v523, %v313
        %526 = vrot.lane.b32.xlu0 %v524, 127
        %v527 = vpop.permute.xlu0 %526
        %v529 = vadd.f32 %v497, %v527
        %s530 = scalar_lea.vmem %s262, 128
        %v531 = vld [vmem:[%s530] sm:$0xff]
        %s532 = sld [smem:[#allocation2 + $0x30]]
        %v533 = vstv %s532
        %v534 = vmul.f32 %v533, %v531
        %v535 = vadd.f32 %v505, %v534
        %s536 = sld [smem:[#allocation2 + $0x31]]
        %v537 = vstv %s536
        %v538 = vmul.f32 %v537, %v531
        %v539 = vadd.f32 %v513, %v538
        %s540 = sld [smem:[#allocation2 + $0x32]]
        %v541 = vstv %s540
        %v542 = vmul.f32 %v541, %v531
        %v543 = vadd.f32 %v521, %v542
        %s544 = sld [smem:[#allocation2 + $0x33]]
        %v545 = vstv %s544
        %v546 = vmul.f32 %v545, %v531
        %v547 = vadd.f32 %v529, %v546
        %s548 = scalar_lea.vmem %s262, 144
        %v549 = vld [vmem:[%s548] sm:$0xff]
        %s550 = sld [smem:[#allocation2 + $0x34]]
        %v551 = vstv %s550
        %v552 = vmul.f32 %v551, %v549
        %v553 = vadd.f32 %v535, %v552
        %s554 = sld [smem:[#allocation2 + $0x35]]
        %v555 = vstv %s554
        %v556 = vmul.f32 %v555, %v549
        %v557 = vadd.f32 %v539, %v556
        %s558 = sld [smem:[#allocation2 + $0x36]]
        %v559 = vstv %s558
        %v560 = vmul.f32 %v559, %v549
        %v561 = vadd.f32 %v543, %v560
        %s562 = sld [smem:[#allocation2 + $0x37]]
        %v563 = vstv %s562
        %v564 = vmul.f32 %v563, %v549
        %v565 = vadd.f32 %v547, %v564
        %s566 = scalar_lea.vmem %s262, 160
        %v567 = vld [vmem:[%s566] sm:$0xff]
        %s568 = sld [smem:[#allocation2 + $0x38]]
        %v569 = vstv %s568
        %v570 = vmul.f32 %v569, %v567
        %v571 = vadd.f32 %v553, %v570
        %s572 = sld [smem:[#allocation2 + $0x39]]
        %v573 = vstv %s572
        %v574 = vmul.f32 %v573, %v567
        %v575 = vadd.f32 %v557, %v574
        %s576 = sld [smem:[#allocation2 + $0x3a]]
        %v577 = vstv %s576
        %v578 = vmul.f32 %v577, %v567
        %v579 = vadd.f32 %v561, %v578
        %s580 = sld [smem:[#allocation2 + $0x3b]]
        %v581 = vstv %s580
        %v582 = vmul.f32 %v581, %v567
        %v583 = vadd.f32 %v565, %v582
        %s584 = scalar_lea.vmem %s262, 176
        %v585 = vld [vmem:[%s584] sm:$0xff]
        %s586 = sld [smem:[#allocation2 + $0x3c]]
        %v587 = vstv %s586
        %v588 = vmul.f32 %v587, %v585
        %v589 = vadd.f32 %v571, %v588
        %s590 = sld [smem:[#allocation2 + $0x3d]]
        %v591 = vstv %s590
        %v592 = vmul.f32 %v591, %v585
        %v593 = vadd.f32 %v575, %v592
        %s594 = sld [smem:[#allocation2 + $0x3e]]
        %v595 = vstv %s594
        %v596 = vmul.f32 %v595, %v585
        %v597 = vadd.f32 %v579, %v596
        %s598 = sld [smem:[#allocation2 + $0x3f]]
        %v599 = vstv %s598
        %v600 = vmul.f32 %v599, %v585
        %v601 = vadd.f32 %v583, %v600
        %s602 = scalar_lea.vmem %s262, 192
        %v603 = vld [vmem:[%s602] sm:$0xff]
        %s604 = sld [smem:[#allocation2 + $0x40]]
        %v605 = vstv %s604
        %v606 = vmul.f32 %v605, %v603
        %v607 = vadd.f32 %v589, %v606
        %s608 = sld [smem:[#allocation2 + $0x41]]
        %v609 = vstv %s608
        %v610 = vmul.f32 %v609, %v603
        %v611 = vadd.f32 %v593, %v610
        %s612 = sld [smem:[#allocation2 + $0x42]]
        %v613 = vstv %s612
        %v614 = vmul.f32 %v613, %v603
        %v615 = vadd.f32 %v597, %v614
        %s616 = sld [smem:[#allocation2 + $0x43]]
        %v617 = vstv %s616
        %v618 = vmul.f32 %v617, %v603
        %v619 = vadd.f32 %v601, %v618
        %s620 = scalar_lea.vmem %s262, 208
        %v621 = vld [vmem:[%s620] sm:$0xff]
        %s622 = sld [smem:[#allocation2 + $0x44]]
        %v623 = vstv %s622
        %v624 = vmul.f32 %v623, %v621
        %v625 = vadd.f32 %v607, %v624
        %s626 = sld [smem:[#allocation2 + $0x45]]
        %v627 = vstv %s626
        %v628 = vmul.f32 %v627, %v621
        %v629 = vadd.f32 %v611, %v628
        %s630 = sld [smem:[#allocation2 + $0x46]]
        %v631 = vstv %s630
        %v632 = vmul.f32 %v631, %v621
        %v633 = vadd.f32 %v615, %v632
        %s634 = sld [smem:[#allocation2 + $0x47]]
        %v635 = vstv %s634
        %v636 = vmul.f32 %v635, %v621
        %v637 = vadd.f32 %v619, %v636
        %s638 = scalar_lea.vmem %s262, 224
        %v639 = vld [vmem:[%s638] sm:$0xff]
        %s640 = sld [smem:[#allocation2 + $0x48]]
        %v641 = vstv %s640
        %v642 = vmul.f32 %v641, %v639
        %v643 = vadd.f32 %v625, %v642
        %s644 = sld [smem:[#allocation2 + $0x49]]
        %v645 = vstv %s644
        %v646 = vmul.f32 %v645, %v639
        %v647 = vadd.f32 %v629, %v646
        %s648 = sld [smem:[#allocation2 + $0x4a]]
        %v649 = vstv %s648
        %v650 = vmul.f32 %v649, %v639
        %v651 = vadd.f32 %v633, %v650
        %s652 = sld [smem:[#allocation2 + $0x4b]]
        %v653 = vstv %s652
        %v654 = vmul.f32 %v653, %v639
        %v655 = vadd.f32 %v637, %v654
        %s656 = scalar_lea.vmem %s262, 240
        %v657 = vld [vmem:[%s656] sm:$0xff]
        %s658 = sld [smem:[#allocation2 + $0x4c]]
        %v659 = vstv %s658
        %v660 = vmul.f32 %v659, %v657
        %v661 = vadd.f32 %v643, %v660
        %s662 = sld [smem:[#allocation2 + $0x4d]]
        %v663 = vstv %s662
        %v664 = vmul.f32 %v663, %v657
        %v665 = vadd.f32 %v647, %v664
        %s666 = sld [smem:[#allocation2 + $0x4e]]
        %v667 = vstv %s666
        %v668 = vmul.f32 %v667, %v657
        %v669 = vadd.f32 %v651, %v668
        %s670 = sld [smem:[#allocation2 + $0x4f]]
        %v671 = vstv %s670
        %v672 = vmul.f32 %v671, %v657
        %v673 = vadd.f32 %v655, %v672
        %s674 = sld [smem:[#allocation2 + $0x50]]
        %v675 = vstv %s674
        %v676 = vmul.f32 %v675, %v531
        %678 = vrot.lane.b32.xlu0 %v676, 127
        %v679 = vpop.permute.xlu0 %678
        %v681 = vadd.f32 %v661, %v679
        %s682 = sld [smem:[#allocation2 + $0x51]]
        %v683 = vstv %s682
        %v684 = vmul.f32 %v683, %v531
        %686 = vrot.lane.b32.xlu0 %v684, 127
        %v687 = vpop.permute.xlu0 %686
        %v689 = vadd.f32 %v665, %v687
        %s690 = sld [smem:[#allocation2 + $0x52]]
        %v691 = vstv %s690
        %v692 = vmul.f32 %v691, %v531
        %694 = vrot.lane.b32.xlu0 %v692, 127
        %v695 = vpop.permute.xlu0 %694
        %v697 = vadd.f32 %v669, %v695
        %s698 = sld [smem:[#allocation2 + $0x53]]
        %v699 = vstv %s698
        %v700 = vmul.f32 %v699, %v531
        %702 = vrot.lane.b32.xlu0 %v700, 127
        %v703 = vpop.permute.xlu0 %702
        %v705 = vadd.f32 %v673, %v703
        %s706 = sld [smem:[#allocation2 + $0x54]]
        %v707 = vstv %s706
        %v708 = vmul.f32 %v707, %v549
        %710 = vrot.lane.b32.xlu0 %v708, 127
        %v711 = vpop.permute.xlu0 %710
        %v713 = vadd.f32 %v681, %v711
        %s714 = sld [smem:[#allocation2 + $0x55]]
        %v715 = vstv %s714
        %v716 = vmul.f32 %v715, %v549
        %718 = vrot.lane.b32.xlu0 %v716, 127
        %v719 = vpop.permute.xlu0 %718
        %v721 = vadd.f32 %v689, %v719
        %s722 = sld [smem:[#allocation2 + $0x56]]
        %v723 = vstv %s722
        %v724 = vmul.f32 %v723, %v549
        %726 = vrot.lane.b32.xlu0 %v724, 127
        %v727 = vpop.permute.xlu0 %726
        %v729 = vadd.f32 %v697, %v727
        %s730 = sld [smem:[#allocation2 + $0x57]]
        %v731 = vstv %s730
        %v732 = vmul.f32 %v731, %v549
        %734 = vrot.lane.b32.xlu0 %v732, 127
        %v735 = vpop.permute.xlu0 %734
        %v737 = vadd.f32 %v705, %v735
        %s738 = sld [smem:[#allocation2 + $0x58]]
        %v739 = vstv %s738
        %v740 = vmul.f32 %v739, %v567
        %742 = vrot.lane.b32.xlu0 %v740, 127
        %v743 = vpop.permute.xlu0 %742
        %v745 = vadd.f32 %v713, %v743
        %s746 = sld [smem:[#allocation2 + $0x59]]
        %v747 = vstv %s746
        %v748 = vmul.f32 %v747, %v567
        %750 = vrot.lane.b32.xlu0 %v748, 127
        %v751 = vpop.permute.xlu0 %750
        %v753 = vadd.f32 %v721, %v751
        %s754 = sld [smem:[#allocation2 + $0x5a]]
        %v755 = vstv %s754
        %v756 = vmul.f32 %v755, %v567
        %758 = vrot.lane.b32.xlu0 %v756, 127
        %v759 = vpop.permute.xlu0 %758
        %v761 = vadd.f32 %v729, %v759
        %s762 = sld [smem:[#allocation2 + $0x5b]]
        %v763 = vstv %s762
        %v764 = vmul.f32 %v763, %v567
        %766 = vrot.lane.b32.xlu0 %v764, 127
        %v767 = vpop.permute.xlu0 %766
        %v769 = vadd.f32 %v737, %v767
        %s770 = sld [smem:[#allocation2 + $0x5c]]
        %v771 = vstv %s770
        %v772 = vmul.f32 %v771, %v585
        %774 = vrot.lane.b32.xlu0 %v772, 127
        %v775 = vpop.permute.xlu0 %774
        %v777 = vadd.f32 %v745, %v775
        %s778 = sld [smem:[#allocation2 + $0x5d]]
        %v779 = vstv %s778
        %v780 = vmul.f32 %v779, %v585
        %782 = vrot.lane.b32.xlu0 %v780, 127
        %v783 = vpop.permute.xlu0 %782
        %v785 = vadd.f32 %v753, %v783
        %s786 = sld [smem:[#allocation2 + $0x5e]]
        %v787 = vstv %s786
        %v788 = vmul.f32 %v787, %v585
        %790 = vrot.lane.b32.xlu0 %v788, 127
        %v791 = vpop.permute.xlu0 %790
        %v793 = vadd.f32 %v761, %v791
        %s794 = sld [smem:[#allocation2 + $0x5f]]
        %v795 = vstv %s794
        %v796 = vmul.f32 %v795, %v585
        %798 = vrot.lane.b32.xlu0 %v796, 127
        %v799 = vpop.permute.xlu0 %798
        %v801 = vadd.f32 %v769, %v799
        %v802 = vld [vmem:[%s262 + $0x1] sm:$0xff]
        %s803 = sld [smem:[#allocation2 + $0x60]]
        %v804 = vstv %s803
        %v805 = vmul.f32 %v804, %v802
        %v806 = vadd.f32 %v777, %v805
        %s807 = sld [smem:[#allocation2 + $0x61]]
        %v808 = vstv %s807
        %v809 = vmul.f32 %v808, %v802
        %v810 = vadd.f32 %v785, %v809
        %s811 = sld [smem:[#allocation2 + $0x62]]
        %v812 = vstv %s811
        %v813 = vmul.f32 %v812, %v802
        %v814 = vadd.f32 %v793, %v813
        %s815 = sld [smem:[#allocation2 + $0x63]]
        %v816 = vstv %s815
        %v817 = vmul.f32 %v816, %v802
        %v818 = vadd.f32 %v801, %v817
        %v819 = vld [vmem:[%s276 + $0x1] sm:$0xff]
        %s820 = sld [smem:[#allocation2 + $0x64]]
        %v821 = vstv %s820
        %v822 = vmul.f32 %v821, %v819
        %v823 = vadd.f32 %v806, %v822
        %s824 = sld [smem:[#allocation2 + $0x65]]
        %v825 = vstv %s824
        %v826 = vmul.f32 %v825, %v819
        %v827 = vadd.f32 %v810, %v826
        %s828 = sld [smem:[#allocation2 + $0x66]]
        %v829 = vstv %s828
        %v830 = vmul.f32 %v829, %v819
        %v831 = vadd.f32 %v814, %v830
        %s832 = sld [smem:[#allocation2 + $0x67]]
        %v833 = vstv %s832
        %v834 = vmul.f32 %v833, %v819
        %v835 = vadd.f32 %v818, %v834
        %v836 = vld [vmem:[%s294 + $0x1] sm:$0xff]
        %s837 = sld [smem:[#allocation2 + $0x68]]
        %v838 = vstv %s837
        %v839 = vmul.f32 %v838, %v836
        %v840 = vadd.f32 %v823, %v839
        %s841 = sld [smem:[#allocation2 + $0x69]]
        %v842 = vstv %s841
        %v843 = vmul.f32 %v842, %v836
        %v844 = vadd.f32 %v827, %v843
        %s845 = sld [smem:[#allocation2 + $0x6a]]
        %v846 = vstv %s845
        %v847 = vmul.f32 %v846, %v836
        %v848 = vadd.f32 %v831, %v847
        %s849 = sld [smem:[#allocation2 + $0x6b]]
        %v850 = vstv %s849
        %v851 = vmul.f32 %v850, %v836
        %v852 = vadd.f32 %v835, %v851
        %v853 = vld [vmem:[%s312 + $0x1] sm:$0xff]
        %s854 = sld [smem:[#allocation2 + $0x6c]]
        %v855 = vstv %s854
        %v856 = vmul.f32 %v855, %v853
        %v857 = vadd.f32 %v840, %v856
        %s858 = sld [smem:[#allocation2 + $0x6d]]
        %v859 = vstv %s858
        %v860 = vmul.f32 %v859, %v853
        %v861 = vadd.f32 %v844, %v860
        %s862 = sld [smem:[#allocation2 + $0x6e]]
        %v863 = vstv %s862
        %v864 = vmul.f32 %v863, %v853
        %v865 = vadd.f32 %v848, %v864
        %s866 = sld [smem:[#allocation2 + $0x6f]]
        %v867 = vstv %s866
        %v868 = vmul.f32 %v867, %v853
        %v869 = vadd.f32 %v852, %v868
        %v870 = vld [vmem:[%s330 + $0x1] sm:$0xff]
        %s871 = sld [smem:[#allocation2 + $0x70]]
        %v872 = vstv %s871
        %v873 = vmul.f32 %v872, %v870
        %v874 = vadd.f32 %v857, %v873
        %s875 = sld [smem:[#allocation2 + $0x71]]
        %v876 = vstv %s875
        %v877 = vmul.f32 %v876, %v870
        %v878 = vadd.f32 %v861, %v877
        %s879 = sld [smem:[#allocation2 + $0x72]]
        %v880 = vstv %s879
        %v881 = vmul.f32 %v880, %v870
        %v882 = vadd.f32 %v865, %v881
        %s883 = sld [smem:[#allocation2 + $0x73]]
        %v884 = vstv %s883
        %v885 = vmul.f32 %v884, %v870
        %v886 = vadd.f32 %v869, %v885
        %v887 = vld [vmem:[%s348 + $0x1] sm:$0xff]
        %s888 = sld [smem:[#allocation2 + $0x74]]
        %v889 = vstv %s888
        %v890 = vmul.f32 %v889, %v887
        %v891 = vadd.f32 %v874, %v890
        %s892 = sld [smem:[#allocation2 + $0x75]]
        %v893 = vstv %s892
        %v894 = vmul.f32 %v893, %v887
        %v895 = vadd.f32 %v878, %v894
        %s896 = sld [smem:[#allocation2 + $0x76]]
        %v897 = vstv %s896
        %v898 = vmul.f32 %v897, %v887
        %v899 = vadd.f32 %v882, %v898
        %s900 = sld [smem:[#allocation2 + $0x77]]
        %v901 = vstv %s900
        %v902 = vmul.f32 %v901, %v887
        %v903 = vadd.f32 %v886, %v902
        %v904 = vld [vmem:[%s366 + $0x1] sm:$0xff]
        %s905 = sld [smem:[#allocation2 + $0x78]]
        %v906 = vstv %s905
        %v907 = vmul.f32 %v906, %v904
        %v908 = vadd.f32 %v891, %v907
        %s909 = sld [smem:[#allocation2 + $0x79]]
        %v910 = vstv %s909
        %v911 = vmul.f32 %v910, %v904
        %v912 = vadd.f32 %v895, %v911
        %s913 = sld [smem:[#allocation2 + $0x7a]]
        %v914 = vstv %s913
        %v915 = vmul.f32 %v914, %v904
        %v916 = vadd.f32 %v899, %v915
        %s917 = sld [smem:[#allocation2 + $0x7b]]
        %v918 = vstv %s917
        %v919 = vmul.f32 %v918, %v904
        %v920 = vadd.f32 %v903, %v919
        %v921 = vld [vmem:[%s384 + $0x1] sm:$0xff]
        %s922 = sld [smem:[#allocation2 + $0x7c]]
        %v923 = vstv %s922
        %v924 = vmul.f32 %v923, %v921
        %v925 = vadd.f32 %v908, %v924
        %s926 = sld [smem:[#allocation2 + $0x7d]]
        %v927 = vstv %s926
        %v928 = vmul.f32 %v927, %v921
        %v929 = vadd.f32 %v912, %v928
        %s930 = sld [smem:[#allocation2 + $0x7e]]
        %v931 = vstv %s930
        %v932 = vmul.f32 %v931, %v921
        %v933 = vadd.f32 %v916, %v932
        %s934 = sld [smem:[#allocation2 + $0x7f]]
        %v935 = vstv %s934
        %v936 = vmul.f32 %v935, %v921
        %v937 = vadd.f32 %v920, %v936
        %s938 = sld [smem:[#allocation2 + $0x80]]
        %v939 = vstv %s938
        %v940 = vmul.f32 %v939, %v802
        %942 = vrot.lane.b32.xlu0 %v940, 127
        %v943 = vpop.permute.xlu0 %942
        %v945 = vadd.f32 %v925, %v943
        %s946 = sld [smem:[#allocation2 + $0x81]]
        %v947 = vstv %s946
        %v948 = vmul.f32 %v947, %v802
        %950 = vrot.lane.b32.xlu0 %v948, 127
        %v951 = vpop.permute.xlu0 %950
        %v953 = vadd.f32 %v929, %v951
        %s954 = sld [smem:[#allocation2 + $0x82]]
        %v955 = vstv %s954
        %v956 = vmul.f32 %v955, %v802
        %958 = vrot.lane.b32.xlu0 %v956, 127
        %v959 = vpop.permute.xlu0 %958
        %v961 = vadd.f32 %v933, %v959
        %s962 = sld [smem:[#allocation2 + $0x83]]
        %v963 = vstv %s962
        %v964 = vmul.f32 %v963, %v802
        %966 = vrot.lane.b32.xlu0 %v964, 127
        %v967 = vpop.permute.xlu0 %966
        %v969 = vadd.f32 %v937, %v967
        %s970 = sld [smem:[#allocation2 + $0x84]]
        %v971 = vstv %s970
        %v972 = vmul.f32 %v971, %v819
        %974 = vrot.lane.b32.xlu0 %v972, 127
        %v975 = vpop.permute.xlu0 %974
        %v977 = vadd.f32 %v945, %v975
        %s978 = sld [smem:[#allocation2 + $0x85]]
        %v979 = vstv %s978
        %v980 = vmul.f32 %v979, %v819
        %982 = vrot.lane.b32.xlu0 %v980, 127
        %v983 = vpop.permute.xlu0 %982
        %v985 = vadd.f32 %v953, %v983
        %s986 = sld [smem:[#allocation2 + $0x86]]
        %v987 = vstv %s986
        %v988 = vmul.f32 %v987, %v819
        %990 = vrot.lane.b32.xlu0 %v988, 127
        %v991 = vpop.permute.xlu0 %990
        %v993 = vadd.f32 %v961, %v991
        %s994 = sld [smem:[#allocation2 + $0x87]]
        %v995 = vstv %s994
        %v996 = vmul.f32 %v995, %v819
        %998 = vrot.lane.b32.xlu0 %v996, 127
        %v999 = vpop.permute.xlu0 %998
        %v1001 = vadd.f32 %v969, %v999
        %s1002 = sld [smem:[#allocation2 + $0x88]]
        %v1003 = vstv %s1002
        %v1004 = vmul.f32 %v1003, %v836
        %1006 = vrot.lane.b32.xlu0 %v1004, 127
        %v1007 = vpop.permute.xlu0 %1006
        %v1009 = vadd.f32 %v977, %v1007
        %s1010 = sld [smem:[#allocation2 + $0x89]]
        %v1011 = vstv %s1010
        %v1012 = vmul.f32 %v1011, %v836
        %1014 = vrot.lane.b32.xlu0 %v1012, 127
        %v1015 = vpop.permute.xlu0 %1014
        %v1017 = vadd.f32 %v985, %v1015
        %s1018 = sld [smem:[#allocation2 + $0x8a]]
        %v1019 = vstv %s1018
        %v1020 = vmul.f32 %v1019, %v836
        %1022 = vrot.lane.b32.xlu0 %v1020, 127
        %v1023 = vpop.permute.xlu0 %1022
        %v1025 = vadd.f32 %v993, %v1023
        %s1026 = sld [smem:[#allocation2 + $0x8b]]
        %v1027 = vstv %s1026
        %v1028 = vmul.f32 %v1027, %v836
        %1030 = vrot.lane.b32.xlu0 %v1028, 127
        %v1031 = vpop.permute.xlu0 %1030
        %v1033 = vadd.f32 %v1001, %v1031
        %s1034 = sld [smem:[#allocation2 + $0x8c]]
        %v1035 = vstv %s1034
        %v1036 = vmul.f32 %v1035, %v853
        %1038 = vrot.lane.b32.xlu0 %v1036, 127
        %v1039 = vpop.permute.xlu0 %1038
        %v1041 = vadd.f32 %v1009, %v1039
        %s1042 = sld [smem:[#allocation2 + $0x8d]]
        %v1043 = vstv %s1042
        %v1044 = vmul.f32 %v1043, %v853
        %1046 = vrot.lane.b32.xlu0 %v1044, 127
        %v1047 = vpop.permute.xlu0 %1046
        %v1049 = vadd.f32 %v1017, %v1047
        %s1050 = sld [smem:[#allocation2 + $0x8e]]
        %v1051 = vstv %s1050
        %v1052 = vmul.f32 %v1051, %v853
        %1054 = vrot.lane.b32.xlu0 %v1052, 127
        %v1055 = vpop.permute.xlu0 %1054
        %v1057 = vadd.f32 %v1025, %v1055
        %s1058 = sld [smem:[#allocation2 + $0x8f]]
        %v1059 = vstv %s1058
        %v1060 = vmul.f32 %v1059, %v853
        %1062 = vrot.lane.b32.xlu0 %v1060, 127
        %v1063 = vpop.permute.xlu0 %1062
        %v1065 = vadd.f32 %v1033, %v1063
        %s1066 = sld [smem:[#allocation7]]
        %v1067 = vstv %s1066
        %v1068 = vadd.f32 %v1041, %v1067
        %v1069 = vmax.f32 %v1068, 0.0
        %vm1070 = vcmask 64512
        %1071 = vst.msk [vmem:[%s253] sm:$0xff] %vm1070, %v1069
        %s1072 = sld [smem:[#allocation7 + $0x1]]
        %v1073 = vstv %s1072
        %v1074 = vadd.f32 %v1049, %v1073
        %v1075 = vmax.f32 %v1074, 0.0
        %s1076 = scalar_lea.vmem %s253, 8 [#allocation8]
        %1077 = vst.msk [vmem:[%s1076] sm:$0xff] %vm1070, %v1075
        %s1078 = sld [smem:[#allocation7 + $0x2]]
        %v1079 = vstv %s1078
        %v1080 = vadd.f32 %v1057, %v1079
        %v1081 = vmax.f32 %v1080, 0.0
        %s1082 = scalar_lea.vmem %s253, 16 [#allocation8]
        %1083 = vst.msk [vmem:[%s1082] sm:$0xff] %vm1070, %v1081
        %s1084 = sld [smem:[#allocation7 + $0x3]]
        %v1085 = vstv %s1084
        %v1086 = vadd.f32 %v1065, %v1085
        %v1087 = vmax.f32 %v1086, 0.0
        %s1088 = scalar_lea.vmem %s253, 24 [#allocation8]
        %1089 = vst.msk [vmem:[%s1088] sm:$0xff] %vm1070, %v1087
        %v1090 = vld [vmem:[%s602] sm:$0xff]
        %v1091 = vld [vmem:[%s530] sm:$0xff]
        %1093 = vrot.lane.b32.xlu0 %v1091, 127
        %v1094 = vpop.permute.xlu0 %1093
        %v1096 = vmax.f32 %v1090, %v1094
        %v1097 = vld [vmem:[%s330 + $0x1] sm:$0xff]
        %v1098 = vld [vmem:[%s262 + $0x1] sm:$0xff]
        %1100 = vrot.lane.b32.xlu0 %v1098, 127
        %v1101 = vpop.permute.xlu0 %1100
        %v1103 = vmax.f32 %v1097, %v1101
        %v1104 = vmax.f32 %v1096, %v1103
        %s1105 = sld [smem:[#allocation5 + $0x4]]
        %v1106 = vstv %s1105
        %v1107 = vmul.f32 %v1104, %v1106
        %s1108 = sld [smem:[#allocation7 + $0x4]]
        %v1109 = vstv %s1108
        %v1110 = vadd.f32 %v1107, %v1109
        %v1111 = vmax.f32 %v1110, 0.0
        %s1112 = scalar_lea.vmem %s253, 32 [#allocation8]
        %1113 = vst.msk [vmem:[%s1112] sm:$0xff] %vm1070, %v1111
        %v1114 = vld [vmem:[%s620] sm:$0xff]
        %v1115 = vld [vmem:[%s548] sm:$0xff]
        %1117 = vrot.lane.b32.xlu0 %v1115, 127
        %v1118 = vpop.permute.xlu0 %1117
        %v1120 = vmax.f32 %v1114, %v1118
        %v1121 = vld [vmem:[%s348 + $0x1] sm:$0xff]
        %v1122 = vld [vmem:[%s276 + $0x1] sm:$0xff]
        %1124 = vrot.lane.b32.xlu0 %v1122, 127
        %v1125 = vpop.permute.xlu0 %1124
        %v1127 = vmax.f32 %v1121, %v1125
        %v1128 = vmax.f32 %v1120, %v1127
        %s1129 = sld [smem:[#allocation5 + $0x5]]
        %v1130 = vstv %s1129
        %v1131 = vmul.f32 %v1128, %v1130
        %s1132 = sld [smem:[#allocation7 + $0x5]]
        %v1133 = vstv %s1132
        %v1134 = vadd.f32 %v1131, %v1133
        %v1135 = vmax.f32 %v1134, 0.0
        %s1136 = scalar_lea.vmem %s253, 40 [#allocation8]
        %1137 = vst.msk [vmem:[%s1136] sm:$0xff] %vm1070, %v1135
        %v1138 = vld [vmem:[%s638] sm:$0xff]
        %v1139 = vld [vmem:[%s566] sm:$0xff]
        %1141 = vrot.lane.b32.xlu0 %v1139, 127
        %v1142 = vpop.permute.xlu0 %1141
        %v1144 = vmax.f32 %v1138, %v1142
        %v1145 = vld [vmem:[%s366 + $0x1] sm:$0xff]
        %v1146 = vld [vmem:[%s294 + $0x1] sm:$0xff]
        %1148 = vrot.lane.b32.xlu0 %v1146, 127
        %v1149 = vpop.permute.xlu0 %1148
        %v1151 = vmax.f32 %v1145, %v1149
        %v1152 = vmax.f32 %v1144, %v1151
        %s1153 = sld [smem:[#allocation5 + $0x6]]
        %v1154 = vstv %s1153
        %v1155 = vmul.f32 %v1152, %v1154
        %s1156 = sld [smem:[#allocation7 + $0x6]]
        %v1157 = vstv %s1156
        %v1158 = vadd.f32 %v1155, %v1157
        %v1159 = vmax.f32 %v1158, 0.0
        %s1160 = scalar_lea.vmem %s253, 48 [#allocation8]
        %1161 = vst.msk [vmem:[%s1160] sm:$0xff] %vm1070, %v1159
        %v1162 = vld [vmem:[%s656] sm:$0xff]
        %v1163 = vld [vmem:[%s584] sm:$0xff]
        %1165 = vrot.lane.b32.xlu0 %v1163, 127
        %v1166 = vpop.permute.xlu0 %1165
        %v1168 = vmax.f32 %v1162, %v1166
        %v1169 = vld [vmem:[%s384 + $0x1] sm:$0xff]
        %v1170 = vld [vmem:[%s312 + $0x1] sm:$0xff]
        %1172 = vrot.lane.b32.xlu0 %v1170, 127
        %v1173 = vpop.permute.xlu0 %1172
        %v1175 = vmax.f32 %v1169, %v1173
        %v1176 = vmax.f32 %v1168, %v1175
        %s1177 = sld [smem:[#allocation5 + $0x7]]
        %v1178 = vstv %s1177
        %v1179 = vmul.f32 %v1176, %v1178
        %s1180 = sld [smem:[#allocation7 + $0x7]]
        %v1181 = vstv %s1180
        %v1182 = vadd.f32 %v1179, %v1181
        %v1183 = vmax.f32 %v1182, 0.0
        %s1184 = scalar_lea.vmem %s253, 56 [#allocation8]
        %1185 = vst.msk [vmem:[%s1184] sm:$0xff] %vm1070, %v1183
        %s1186 = sand.u32 %s133, 1
        %s1187 = scalar_lea.sflag [#allocation3], %s1186
        %s1188 = sand.u32 %s133, 1
        %s1189 = smul.addr %s1188, 64
        %s1190 = scalar_lea.vmem [#allocation8], %s1189
        // Predicated region
        $region49: #{downsampler_block.1} parent=35 // pred_check
          %p1191 = pneg %p143
        $region50: #{downsampler_block.1} parent=35 // pred_check_branch
          %1193 = sbr.rel (%p1191) target = $region52
        $region51: #{downsampler_block.1} parent=35 // pred_region
          %1195 = vsyncadd %s1187, 0
          %s1196 = smul.addr %s24, 8
          %s1197 = sadd.s32 %s25, %s1196
          %s1198 = smul.addr %s1197, 8
          %s1199 = scalar_lea.hbm %s4, %s1198
          %s1200 = sshll.u32 %s1190, 4
          %s1201 = int_to_ptr.vmem [resolvable:$true] %s1200
          %s1202 = sshll.u32 %s1199, 4
          %s1203 = int_to_ptr.hbm [resolvable:$true] %s1202
          %1208 = dma.vmem_to_hbm [thread:$0]  %s1201, 1024, %s1203, %s1187, 128, 128, 8
        $region52: #{downsampler_block.1} parent=35 // pred_fallthru
          _
      $region36: #{downsampler_block.1} parent=5 // pred_fallthru
        _
      %p1209 = scmp.le.s32.totalorder 2, %s15
      // Predicated region
      $region53: #{downsampler_block.1} parent=5 // pred_check
        %p1210 = pneg %p1209
      $region54: #{downsampler_block.1} parent=5 // pred_check_branch
        %1212 = sbr.rel (%p1210) target = $region56
      $region55: #{downsampler_block.1} parent=5 // pred_region
        %s1213 = ssub.s32 %s15, 2
        // Predicated region
        $region57: #{downsampler_block.1} parent=55 // pred_check
          %p1214 = pneg %p149
        $region58: #{downsampler_block.1} parent=55 // pred_check_branch
          %1216 = sbr.rel (%p1214) target = $region60
        $region59: #{downsampler_block.1} parent=55 // pred_region
          %s1217 = sand.u32 %s134, 1
          %s1218 = scalar_lea.sflag [#allocation3], %s1217
          %s1219 = sand.u32 %s134, 1
          %s1220 = smul.addr %s1219, 64
          %s1221 = scalar_lea.vmem [#allocation8], %s1220
          %1223 = dma.done %s1218, 1024
        $region60: #{downsampler_block.1} parent=55 // pred_fallthru
          _
      $region56: #{downsampler_block.1} parent=5 // pred_fallthru
        _
    $region6: #{downsampler_block.1} parent=1 // loop_footer
      %s19 = sadd.s32 1, %s15
    $region7: #{downsampler_block.1} parent=1 // loop_footer_branch
      %14 = sbr.rel target = $region3
    $region8: #{downsampler_block.1} parent=1 // loop_exit
      _
    %1224 = vsyncpa [#allocation3], 1
    %s1225 = scalar_lea.sflag [#allocation3], 1
    %1226 = vsyncpa %s1225, 1
    %1227 = vsyncpa [#allocation4], 1
    %s1228 = scalar_lea.sflag [#allocation4], 1
    %1229 = vsyncpa %s1228, 1
    %1230 = vsyncpa [#allocation6], 1

</llo_original>
